<compile_context>
chip_gen: v6e
topology: v6e:2x2x1
jax: 0.10.0
libtpu: 0.0.40
codegen_flags: <defaults>
</compile_context>

<pallas_src>
import numpy as np
import jax
import jax.numpy as jnp
from jax.experimental import pallas as pl
from jax.experimental.pallas import tpu as pltpu

F32 = jnp.float32
BF16 = jnp.bfloat16
NEG_INF = -1e9
CLS_PAD = 128          # lane-dense padded class (num_texts) axis


# ----------------------------- shared math helpers ---------------------------
def _layer_norm(x, g, b, eps=1e-5):
    mu = jnp.mean(x, axis=-1, keepdims=True)
    xc = x - mu
    var = jnp.mean(xc * xc, axis=-1, keepdims=True)
    return xc * jax.lax.rsqrt(var + eps) * g + b


def _softmax_last(x):
    m = jnp.max(x, axis=-1, keepdims=True)
    e = jnp.exp(x - m)
    return e / jnp.sum(e, axis=-1, keepdims=True)


def _transformer_block(x, key_mask, ln1g, ln1b, wqkv, bqkv, wo, bo,
                       ln2g, ln2b, w1, b1, w2, b2):
    """Pre-LN single-head attention + MLP block.

    x: [S, D] f32, key_mask: [1, S] additive f32.  Matmul operands are bf16
    (f32 MXU accumulation), all elementwise math is f32.  Pure jnp, so it is
    reused both inside the Pallas kernel bodies and for the JAX reference.
    """
    d = x.shape[-1]
    # --- single-head attention (keeps every slice lane-dense at D=128) ---
    h = _layer_norm(x, ln1g, ln1b)
    qkv = jnp.dot(h.astype(BF16), wqkv, preferred_element_type=F32) + bqkv
    q, k, v = qkv[:, :d], qkv[:, d:2 * d], qkv[:, 2 * d:]
    s = jnp.einsum("qd,kd->qk", q.astype(BF16), k.astype(BF16),
                   preferred_element_type=F32) * (1.0 / d ** 0.5)
    p = _softmax_last(s + key_mask)
    attn = jnp.dot(p.astype(BF16), v.astype(BF16), preferred_element_type=F32)
    o = jnp.dot(attn.astype(BF16), wo, preferred_element_type=F32) + bo
    x = x + o
    # --- MLP ---
    h = _layer_norm(x, ln2g, ln2b)
    m = jnp.dot(h.astype(BF16), w1, preferred_element_type=F32) + b1
    m = jax.nn.gelu(m, approximate=True)
    m = jnp.dot(m.astype(BF16), w2, preferred_element_type=F32) + b2
    return x + m


# --------------------------------- kernels -----------------------------------
def _text_tower_kernel(tok_ref, kmask_ref, poolw_ref,
                       ln1g, ln1b, wqkv, bqkv, wo, bo,
                       ln2g, ln2b, w1, b1, w2, b2, feat_ref):
    """One text per grid step: embedded tokens -> block -> pooled feature."""
    x = _transformer_block(tok_ref[...], kmask_ref[...],
                           ln1g[...], ln1b[...], wqkv[...], bqkv[...],
                           wo[...], bo[...], ln2g[...], ln2b[...],
                           w1[...], b1[...], w2[...], b2[...])
    # hidden_states[-2][:, 1:] -> masked mean over non-BOS, non-pad tokens
    feat_ref[...] = jnp.sum(x * poolw_ref[...], axis=0, keepdims=True)   # [1, D]


def _vision_logits_kernel(patch_ref, wpatch_ref, poscls_ref, kmask_ref, poolw_ref,
                          ln1g, ln1b, wqkv, bqkv, wo, bo,
                          ln2g, ln2b, w1, b1, w2, b2,
                          txt_t_ref, cmask_ref, probs_ref):
    """One image per grid step: patch-embed -> block -> pool -> softmax logits."""
    # patch embedding (conv-as-matmul; CLS/pos/patch-bias pre-folded in poscls)
    tok = jnp.dot(patch_ref[...], wpatch_ref[...], preferred_element_type=F32)
    x = tok + poscls_ref[...]                                            # [S_pad, D] f32
    x = _transformer_block(x, kmask_ref[...], ln1g[...], ln1b[...],
                           wqkv[...], bqkv[...], wo[...], bo[...],
                           ln2g[...], ln2b[...], w1[...], b1[...],
                           w2[...], b2[...])
    # hidden_states[-2][:, 1:].mean(dim=1)
    feat = jnp.sum(x * poolw_ref[...], axis=0, keepdims=True)            # [1, D] f32
    # logits = softmax(img_feat @ text_feat.T) on a lane-dense 128-class pad
    s = jnp.dot(feat.astype(BF16), txt_t_ref[...],
                preferred_element_type=F32) + cmask_ref[...]             # [1, 128]
    probs_ref[...] = _softmax_last(s)


# --------------------------------- wrapper ------------------------------------
class ImageClassificationModelLLVAPallas:
    """Synthetic LLaVA-style image/text classifier; forward(images, texts) -> probs."""

    _TOWER_KEYS = ("ln1g", "ln1b", "wqkv", "bqkv", "wo", "bo",
                   "ln2g", "ln2b", "w1", "b1", "w2", "b2")

    def __init__(self, *, in_chans=3, image_size=16, patch=4, hidden=128,
                 mlp_hidden=256, text_len=12, vocab=64, seed=0):
        assert image_size % patch == 0
        self.patch = patch
        self.D = hidden
        self.Dm = mlp_hidden
        self.P = (image_size // patch) ** 2            # patch tokens
        self.S = self.P + 1                            # + [CLS]
        self.S_pad = ((self.S + 7) // 8) * 8
        self.T = text_len
        self.T_pad = ((text_len + 7) // 8) * 8
        self.vocab = vocab
        dp = in_chans * patch * patch
        self.Dp_pad = max(128, ((dp + 127) // 128) * 128)

        keys = iter(jax.random.split(jax.random.PRNGKey(seed), 32))

        def nrm(shape, scale):
            return jax.random.normal(next(keys), shape, F32) * scale

        # ------------------------- vision tower --------------------------------
        w_patch = nrm((dp, hidden), dp ** -0.5)
        b_patch = nrm((hidden,), 0.02)
        cls_tok = nrm((hidden,), 0.02)
        pos_emb = nrm((self.S, hidden), 0.02)
        # fold CLS token + positional embedding + patch-embed bias into one table
        poscls = jnp.zeros((self.S_pad, hidden), F32)
        poscls = poscls.at[0].set(cls_tok + pos_emb[0])
        poscls = poscls.at[1:self.S].set(pos_emb[1:] + b_patch[None, :])
        self.vis_poscls = poscls
        self.vis_wpatch = (jnp.zeros((self.Dp_pad, hidden), F32)
                           .at[:dp].set(w_patch).astype(BF16))           # bf16 MXU weight
        self.vis_tower = self._init_tower(next(keys), hidden, mlp_hidden)
        tok_valid = jnp.arange(self.S_pad) < self.S
        self.vis_kmask = jnp.where(tok_valid, 0.0, NEG_INF).astype(F32)[None, :]   # [1,S_pad]
        is_patch = tok_valid & (jnp.arange(self.S_pad) >= 1)
        self.vis_poolw = (is_patch.astype(F32) / self.P)[:, None]                  # [S_pad,1]

        # -------------------------- text tower ---------------------------------
        self.tok_table = nrm((vocab, hidden), 0.02)
        self.txt_pos = nrm((self.T_pad, hidden), 0.02)
        self.txt_tower = self._init_tower(next(keys), hidden, mlp_hidden)

    @staticmethod
    def _init_tower(key, d, dm):
        ks = iter(jax.random.split(key, 16))

        def nrm(shape, scale):
            return jax.random.normal(next(ks), shape, F32) * scale

        return dict(
            ln1g=1.0 + nrm((1, d), 0.1), ln1b=nrm((1, d), 0.02),
            wqkv=nrm((d, 3 * d), d ** -0.5).astype(BF16), bqkv=nrm((1, 3 * d), 0.02),
            wo=nrm((d, d), d ** -0.5).astype(BF16), bo=nrm((1, d), 0.02),
            ln2g=1.0 + nrm((1, d), 0.1), ln2b=nrm((1, d), 0.02),
            w1=nrm((d, dm), d ** -0.5).astype(BF16), b1=nrm((1, dm), 0.02),
            w2=nrm((dm, d), dm ** -0.5).astype(BF16), b2=nrm((1, d), 0.02),
        )

    def _tower_args(self, tower):
        return tuple(tower[k] for k in self._TOWER_KEYS)

    # --------------------------- wrapper-side glue -----------------------------
    def _prep_patches(self, x):
        """NCHW images -> [B, S_pad, Dp_pad] bf16 patch matrix (row 0 = CLS slot).

        All reshapes / zero-padding happen here, not in the kernel.  For large
        images this unfold could be fused into the kernel via strided pl.ds
        slices to avoid the intermediate HBM tensor.
        """
        x = x.astype(F32)
        b, c, h, w = x.shape
        p = self.patch
        hp, wp = h // p, w // p
        x = x.reshape(b, c, hp, p, wp, p).transpose(0, 2, 4, 1, 3, 5)
        patches = x.reshape(b, hp * wp, c * p * p)
        out = jnp.zeros((b, self.S_pad, self.Dp_pad), F32)
        out = out.at[:, 1:self.S, :patches.shape[-1]].set(patches)
        return out.astype(BF16)

    def _prep_texts(self, texts):
        """Deterministic char tokenizer + embedding lookup (wrapper glue).

        TODO(synk): the real LLaVA text path uses a pretrained tokenizer/LLM;
        a deterministic ord()-hash char tokenizer stands in for it here.
        """
        n = len(texts)
        ids = np.zeros((n, self.T_pad), np.int32)
        for i, t in enumerate(texts):
            toks = [1] + [2 + (ord(ch) % (self.vocab - 2)) for ch in t[: self.T - 1]]
            ids[i, : len(toks)] = toks
        ids = jnp.asarray(ids)
        emb = self.tok_table[ids] + self.txt_pos[None, :, :]             # [N,T_pad,D] f32
        valid = ids != 0
        kmask = jnp.where(valid, 0.0, NEG_INF).astype(F32)[:, None, :]   # [N,1,T_pad]
        pw = valid.astype(F32).at[:, 0].set(0.0)                         # drop BOS ([:, 1:])
        pw = pw / jnp.sum(pw, axis=1, keepdims=True)
        return emb, kmask, pw[:, :, None]                                # [N,T_pad,1]

    # ------------------------------ Pallas calls --------------------------------
    def _encode_texts(self, emb, kmask, poolw):
        n, t, d = emb.shape[0], self.T_pad, self.D
        resident = lambda: pl.BlockSpec(memory_space=pltpu.MemorySpace.VMEM)
        feats = pl.pallas_call(
            _text_tower_kernel,
            out_shape=jax.ShapeDtypeStruct((n, 1, d), F32),
            grid=(n,),
            in_specs=[
                pl.BlockSpec((None, t, d), lambda i: (i, 0, 0)),
                pl.BlockSpec((None, 1, t), lambda i: (i, 0, 0)),
                pl.BlockSpec((None, t, 1), lambda i: (i, 0, 0)),
            ] + [resident() for _ in range(12)],
            out_specs=pl.BlockSpec((None, 1, d), lambda i: (i, 0, 0)),
            compiler_params=pltpu.CompilerParams(
                dimension_semantics=("parallel",),
                vmem_limit_bytes=32 * 1024 * 1024),
        )(emb, kmask, poolw, *self._tower_args(self.txt_tower))
        return feats[:, 0, :]                                            # [N, D] f32

    def _vision_logits(self, patches, txt_t, cmask):
        b, s = patches.shape[0], self.S_pad
        resident = lambda: pl.BlockSpec(memory_space=pltpu.MemorySpace.VMEM)
        probs = pl.pallas_call(
            _vision_logits_kernel,
            out_shape=jax.ShapeDtypeStruct((b, 1, CLS_PAD), F32),
            grid=(b,),
            in_specs=[pl.BlockSpec((None, s, self.Dp_pad), lambda i: (i, 0, 0))]
                     + [resident() for _ in range(18)],
            out_specs=pl.BlockSpec((None, 1, CLS_PAD), lambda i: (i, 0, 0)),
            compiler_params=pltpu.CompilerParams(
                dimension_semantics=("parallel",),
                vmem_limit_bytes=32 * 1024 * 1024),
        )(patches, self.vis_wpatch, self.vis_poscls, self.vis_kmask, self.vis_poolw,
          *self._tower_args(self.vis_tower), txt_t, cmask)
        return probs[:, 0, :]                                            # [B, 128] f32

    # --------------------------------- forward ----------------------------------
    def forward(self, images, texts):
        x = images["pixel_values"]                                       # [B, C, H, W]
        n = len(texts)
        patches = self._prep_patches(x)
        emb, kmask, poolw = self._prep_texts(texts)

        # text branch: hidden_states[-2][:, 1:] mean-pooled to a 2-D matrix
        # TODO(synk): the reference applies .t() to a 3-D text hidden state,
        # which is ill-typed; we mean-pool non-BOS tokens to get [num_texts, D].
        text_feats = self._encode_texts(emb, kmask, poolw)               # [N, D]

        # lane-dense (128-wide) padded, pre-transposed text matrix + class mask
        txt_t = (jnp.zeros((self.D, CLS_PAD), F32)
                 .at[:, :n].set(text_feats.T).astype(BF16))              # [D, 128] bf16
        cmask = jnp.where(jnp.arange(CLS_PAD) < n, 0.0, NEG_INF).astype(F32)[None, :]

        probs = self._vision_logits(patches, txt_t, cmask)               # [B, 128]
        return probs[:, :n]                                              # softmax probs

    # ----------------------- pure-JAX reference (same math) ---------------------
    def forward_ref(self, images, texts):
        n = len(texts)
        patches = self._prep_patches(images["pixel_values"])
        emb, kmask, poolw = self._prep_texts(texts)
        t_args = self._tower_args(self.txt_tower)
        tf = []
        for i in range(n):
            h = _transformer_block(emb[i], kmask[i], *t_args)
            tf.append(jnp.sum(h * poolw[i], axis=0, keepdims=True))
        text_feats = jnp.concatenate(tf, axis=0)
        txt_t = (jnp.zeros((self.D, CLS_PAD), F32)
                 .at[:, :n].set(text_feats.T).astype(BF16))
        cmask = jnp.where(jnp.arange(CLS_PAD) < n, 0.0, NEG_INF).astype(F32)[None, :]
        v_args = self._tower_args(self.vis_tower)
        out = []
        for b in range(patches.shape[0]):
            tok = jnp.dot(patches[b], self.vis_wpatch, preferred_element_type=F32)
            h = _transformer_block(tok + self.vis_poscls, self.vis_kmask, *v_args)
            feat = jnp.sum(h * self.vis_poolw, axis=0, keepdims=True)
            s = jnp.dot(feat.astype(BF16), txt_t, preferred_element_type=F32) + cmask
            out.append(_softmax_last(s))
        return jnp.concatenate(out, axis=0)[:, :n]


# ----------------------------------- main -------------------------------------
if __name__ == "__main__":
    key = jax.random.PRNGKey(0)
    B, C, H, W = 2, 3, 16, 16
    pixel_values = jax.random.normal(key, (B, C, H, W), F32)
    images = {"pixel_values": pixel_values}
    texts = ["no finding", "cardiomegaly", "pleural effusion", "pneumonia",
             "atelectasis", "edema", "consolidation", "pneumothorax"]

    model = ImageClassificationModelLLVAPallas(
        in_chans=C, image_size=H, patch=4, hidden=128, mlp_hidden=256,
        text_len=12, vocab=64, seed=0)

    probs = model.forward(images, texts)
    jax.block_until_ready(probs)

    ref = model.forward_ref(images, texts)
    assert probs.shape == (B, len(texts))
    assert jnp.allclose(jnp.sum(probs, axis=-1), 1.0, atol=1e-3)
    assert jnp.allclose(probs, ref, atol=1e-2, rtol=1e-2), \
        f"max abs diff {float(jnp.max(jnp.abs(probs - ref)))}"

    print("KERNEL_OK")
</pallas_src>

<mosaic_0001>
module attributes {stable_mosaic.version = 11 : i64} {
  func.func @_text_tower_kernel(%arg0: i32, %arg1: memref<1x16x128xf32, #tpu.memory_space<vmem>>, %arg2: memref<1x1x16xf32, #tpu.memory_space<vmem>>, %arg3: memref<1x16x1xf32, #tpu.memory_space<vmem>>, %arg4: memref<1x128xf32, #tpu.memory_space<vmem>>, %arg5: memref<1x128xf32, #tpu.memory_space<vmem>>, %arg6: memref<128x384xbf16, #tpu.memory_space<vmem>>, %arg7: memref<1x384xf32, #tpu.memory_space<vmem>>, %arg8: memref<128x128xbf16, #tpu.memory_space<vmem>>, %arg9: memref<1x128xf32, #tpu.memory_space<vmem>>, %arg10: memref<1x128xf32, #tpu.memory_space<vmem>>, %arg11: memref<1x128xf32, #tpu.memory_space<vmem>>, %arg12: memref<128x256xbf16, #tpu.memory_space<vmem>>, %arg13: memref<1x256xf32, #tpu.memory_space<vmem>>, %arg14: memref<256x128xbf16, #tpu.memory_space<vmem>>, %arg15: memref<1x128xf32, #tpu.memory_space<vmem>>, %arg16: memref<1x1x128xf32, #tpu.memory_space<vmem>>) attributes {dimension_semantics = [#tpu.dimension_semantics<parallel>], iteration_bounds = array<i64: 8>, scalar_prefetch = 0 : i64, scratch_operands = 0 : i64, tpu.core_type = #tpu.core_type<tc>, window_params = [{transform_indices = @transform_0, window_bounds = array<i64: 1, 16, 128>}, {transform_indices = @transform_1, window_bounds = array<i64: 1, 1, 16>}, {transform_indices = @transform_2, window_bounds = array<i64: 1, 16, 1>}, {pipeline_mode = #tpu.pipeline_mode<synchronous>, transform_indices = @transform_3, window_bounds = array<i64: 1, 128>}, {pipeline_mode = #tpu.pipeline_mode<synchronous>, transform_indices = @transform_4, window_bounds = array<i64: 1, 128>}, {pipeline_mode = #tpu.pipeline_mode<synchronous>, transform_indices = @transform_5, window_bounds = array<i64: 128, 384>}, {pipeline_mode = #tpu.pipeline_mode<synchronous>, transform_indices = @transform_6, window_bounds = array<i64: 1, 384>}, {pipeline_mode = #tpu.pipeline_mode<synchronous>, transform_indices = @transform_7, window_bounds = array<i64: 128, 128>}, {pipeline_mode = #tpu.pipeline_mode<synchronous>, transform_indices = @transform_8, window_bounds = array<i64: 1, 128>}, {pipeline_mode = #tpu.pipeline_mode<synchronous>, transform_indices = @transform_9, window_bounds = array<i64: 1, 128>}, {pipeline_mode = #tpu.pipeline_mode<synchronous>, transform_indices = @transform_10, window_bounds = array<i64: 1, 128>}, {pipeline_mode = #tpu.pipeline_mode<synchronous>, transform_indices = @transform_11, window_bounds = array<i64: 128, 256>}, {pipeline_mode = #tpu.pipeline_mode<synchronous>, transform_indices = @transform_12, window_bounds = array<i64: 1, 256>}, {pipeline_mode = #tpu.pipeline_mode<synchronous>, transform_indices = @transform_13, window_bounds = array<i64: 256, 128>}, {pipeline_mode = #tpu.pipeline_mode<synchronous>, transform_indices = @transform_14, window_bounds = array<i64: 1, 128>}, {transform_indices = @transform_15, window_bounds = array<i64: 1, 1, 128>}]} {
    %c0 = arith.constant 0 : index
    %c0_0 = arith.constant 0 : index
    %c0_1 = arith.constant 0 : index
    %0 = vector.load %arg1[%c0, %c0_0, %c0_1] : memref<1x16x128xf32, #tpu.memory_space<vmem>>, vector<1x16x128xf32>
    %1 = vector.shape_cast %0 : vector<1x16x128xf32> to vector<16x128xf32>
    %c0_2 = arith.constant 0 : index
    %c0_3 = arith.constant 0 : index
    %c0_4 = arith.constant 0 : index
    %2 = vector.load %arg2[%c0_2, %c0_3, %c0_4] : memref<1x1x16xf32, #tpu.memory_space<vmem>>, vector<1x1x16xf32>
    %3 = vector.shape_cast %2 : vector<1x1x16xf32> to vector<1x16xf32>
    %c0_5 = arith.constant 0 : index
    %c0_6 = arith.constant 0 : index
    %4 = vector.load %arg4[%c0_5, %c0_6] : memref<1x128xf32, #tpu.memory_space<vmem>>, vector<1x128xf32>
    %c0_7 = arith.constant 0 : index
    %c0_8 = arith.constant 0 : index
    %5 = vector.load %arg5[%c0_7, %c0_8] : memref<1x128xf32, #tpu.memory_space<vmem>>, vector<1x128xf32>
    %c0_9 = arith.constant 0 : index
    %c0_10 = arith.constant 0 : index
    %6 = vector.load %arg6[%c0_9, %c0_10] : memref<128x384xbf16, #tpu.memory_space<vmem>>, vector<128x384xbf16>
    %c0_11 = arith.constant 0 : index
    %c0_12 = arith.constant 0 : index
    %7 = vector.load %arg7[%c0_11, %c0_12] : memref<1x384xf32, #tpu.memory_space<vmem>>, vector<1x384xf32>
    %c0_13 = arith.constant 0 : index
    %c0_14 = arith.constant 0 : index
    %8 = vector.load %arg8[%c0_13, %c0_14] : memref<128x128xbf16, #tpu.memory_space<vmem>>, vector<128x128xbf16>
    %c0_15 = arith.constant 0 : index
    %c0_16 = arith.constant 0 : index
    %9 = vector.load %arg9[%c0_15, %c0_16] : memref<1x128xf32, #tpu.memory_space<vmem>>, vector<1x128xf32>
    %c0_17 = arith.constant 0 : index
    %c0_18 = arith.constant 0 : index
    %10 = vector.load %arg10[%c0_17, %c0_18] : memref<1x128xf32, #tpu.memory_space<vmem>>, vector<1x128xf32>
    %c0_19 = arith.constant 0 : index
    %c0_20 = arith.constant 0 : index
    %11 = vector.load %arg11[%c0_19, %c0_20] : memref<1x128xf32, #tpu.memory_space<vmem>>, vector<1x128xf32>
    %c0_21 = arith.constant 0 : index
    %c0_22 = arith.constant 0 : index
    %12 = vector.load %arg12[%c0_21, %c0_22] : memref<128x256xbf16, #tpu.memory_space<vmem>>, vector<128x256xbf16>
    %c0_23 = arith.constant 0 : index
    %c0_24 = arith.constant 0 : index
    %13 = vector.load %arg13[%c0_23, %c0_24] : memref<1x256xf32, #tpu.memory_space<vmem>>, vector<1x256xf32>
    %c0_25 = arith.constant 0 : index
    %c0_26 = arith.constant 0 : index
    %14 = vector.load %arg14[%c0_25, %c0_26] : memref<256x128xbf16, #tpu.memory_space<vmem>>, vector<256x128xbf16>
    %c0_27 = arith.constant 0 : index
    %c0_28 = arith.constant 0 : index
    %15 = vector.load %arg15[%c0_27, %c0_28] : memref<1x128xf32, #tpu.memory_space<vmem>>, vector<1x128xf32>
    %cst = arith.constant dense<0.000000e+00> : vector<16xf32>
    %16 = vector.multi_reduction <add>, %1, %cst [1] : vector<16x128xf32> to vector<16xf32>
    %17 = vector.shape_cast %16 : vector<16xf32> to vector<16x1xf32>
    %cst_29 = arith.constant 1.280000e+02 : f32
    %18 = vector.broadcast %cst_29 : f32 to vector<16x1xf32>
    %19 = arith.divf %17, %18 : vector<16x1xf32>
    %20 = vector.broadcast %19 : vector<16x1xf32> to vector<16x128xf32>
    %21 = arith.subf %1, %20 : vector<16x128xf32>
    %22 = arith.mulf %21, %21 : vector<16x128xf32>
    %cst_30 = arith.constant dense<0.000000e+00> : vector<16xf32>
    %23 = vector.multi_reduction <add>, %22, %cst_30 [1] : vector<16x128xf32> to vector<16xf32>
    %24 = vector.shape_cast %23 : vector<16xf32> to vector<16x1xf32>
    %cst_31 = arith.constant 1.280000e+02 : f32
    %25 = vector.broadcast %cst_31 : f32 to vector<16x1xf32>
    %26 = arith.divf %24, %25 : vector<16x1xf32>
    %cst_32 = arith.constant 9.99999974E-6 : f32
    %27 = vector.broadcast %cst_32 : f32 to vector<16x1xf32>
    %28 = arith.addf %26, %27 : vector<16x1xf32>
    %29 = math.rsqrt %28 : vector<16x1xf32>
    %30 = vector.broadcast %29 : vector<16x1xf32> to vector<16x128xf32>
    %31 = arith.mulf %21, %30 : vector<16x128xf32>
    %32 = vector.broadcast %4 : vector<1x128xf32> to vector<16x128xf32>
    %33 = arith.mulf %31, %32 : vector<16x128xf32>
    %34 = vector.broadcast %5 : vector<1x128xf32> to vector<16x128xf32>
    %35 = arith.addf %33, %34 : vector<16x128xf32>
    %36 = arith.truncf %35 : vector<16x128xf32> to vector<16x128xbf16>
    %cst_33 = arith.constant dense<0.000000e+00> : vector<16x384xf32>
    %37 = tpu.matmul %36, %6, %cst_33 {dimension_numbers = #tpu.dot_dimension_numbers<[1], [0], [0], [1], [0, 0, 1, 1], [], []>} : vector<16x128xbf16>, vector<128x384xbf16>, vector<16x384xf32> -> vector<16x384xf32>
    %38 = vector.broadcast %7 : vector<1x384xf32> to vector<16x384xf32>
    %39 = arith.addf %37, %38 : vector<16x384xf32>
    %40 = vector.extract_strided_slice %39 {offsets = [0, 0], sizes = [16, 128], strides = [1, 1]} : vector<16x384xf32> to vector<16x128xf32>
    %41 = vector.extract_strided_slice %39 {offsets = [0, 128], sizes = [16, 128], strides = [1, 1]} : vector<16x384xf32> to vector<16x128xf32>
    %42 = vector.extract_strided_slice %39 {offsets = [0, 256], sizes = [16, 128], strides = [1, 1]} : vector<16x384xf32> to vector<16x128xf32>
    %43 = arith.truncf %40 : vector<16x128xf32> to vector<16x128xbf16>
    %44 = arith.truncf %41 : vector<16x128xf32> to vector<16x128xbf16>
    "tpu.trace_start"() <{level = 10 : i32, message = "qd,kd->qk"}> : () -> ()
    %cst_34 = arith.constant dense<0.000000e+00> : vector<16x16xf32>
    %45 = tpu.matmul %43, %44, %cst_34 {dimension_numbers = #tpu.dot_dimension_numbers<[1], [1], [0], [0], [0, 0, 1, 0], [], []>} : vector<16x128xbf16>, vector<16x128xbf16>, vector<16x16xf32> -> vector<16x16xf32>
    "tpu.trace_stop"() : () -> ()
    %cst_35 = arith.constant 0.0883883461 : f32
    %46 = vector.broadcast %cst_35 : f32 to vector<16x16xf32>
    %47 = arith.mulf %45, %46 : vector<16x16xf32>
    %48 = vector.broadcast %3 : vector<1x16xf32> to vector<16x16xf32>
    %49 = arith.addf %47, %48 : vector<16x16xf32>
    %cst_36 = arith.constant dense<0xFF800000> : vector<16xf32>
    %50 = vector.multi_reduction <maximumf>, %49, %cst_36 [1] : vector<16x16xf32> to vector<16xf32>
    %51 = vector.shape_cast %50 : vector<16xf32> to vector<16x1xf32>
    %52 = vector.broadcast %51 : vector<16x1xf32> to vector<16x16xf32>
    %53 = arith.subf %49, %52 : vector<16x16xf32>
    %54 = math.exp %53 : vector<16x16xf32>
    %cst_37 = arith.constant dense<0.000000e+00> : vector<16xf32>
    %55 = vector.multi_reduction <add>, %54, %cst_37 [1] : vector<16x16xf32> to vector<16xf32>
    %56 = vector.shape_cast %55 : vector<16xf32> to vector<16x1xf32>
    %57 = vector.broadcast %56 : vector<16x1xf32> to vector<16x16xf32>
    %58 = arith.divf %54, %57 : vector<16x16xf32>
    %59 = arith.truncf %58 : vector<16x16xf32> to vector<16x16xbf16>
    %60 = arith.truncf %42 : vector<16x128xf32> to vector<16x128xbf16>
    %cst_38 = arith.constant dense<0.000000e+00> : vector<16x128xf32>
    %61 = tpu.matmul %59, %60, %cst_38 {dimension_numbers = #tpu.dot_dimension_numbers<[1], [0], [0], [1], [0, 0, 1, 1], [], []>} : vector<16x16xbf16>, vector<16x128xbf16>, vector<16x128xf32> -> vector<16x128xf32>
    %62 = arith.truncf %61 : vector<16x128xf32> to vector<16x128xbf16>
    %cst_39 = arith.constant dense<0.000000e+00> : vector<16x128xf32>
    %63 = tpu.matmul %62, %8, %cst_39 {dimension_numbers = #tpu.dot_dimension_numbers<[1], [0], [0], [1], [0, 0, 1, 1], [], []>} : vector<16x128xbf16>, vector<128x128xbf16>, vector<16x128xf32> -> vector<16x128xf32>
    %64 = vector.broadcast %9 : vector<1x128xf32> to vector<16x128xf32>
    %65 = arith.addf %63, %64 : vector<16x128xf32>
    %66 = arith.addf %1, %65 : vector<16x128xf32>
    %cst_40 = arith.constant dense<0.000000e+00> : vector<16xf32>
    %67 = vector.multi_reduction <add>, %66, %cst_40 [1] : vector<16x128xf32> to vector<16xf32>
    %68 = vector.shape_cast %67 : vector<16xf32> to vector<16x1xf32>
    %cst_41 = arith.constant 1.280000e+02 : f32
    %69 = vector.broadcast %cst_41 : f32 to vector<16x1xf32>
    %70 = arith.divf %68, %69 : vector<16x1xf32>
    %71 = vector.broadcast %70 : vector<16x1xf32> to vector<16x128xf32>
    %72 = arith.subf %66, %71 : vector<16x128xf32>
    %73 = arith.mulf %72, %72 : vector<16x128xf32>
    %cst_42 = arith.constant dense<0.000000e+00> : vector<16xf32>
    %74 = vector.multi_reduction <add>, %73, %cst_42 [1] : vector<16x128xf32> to vector<16xf32>
    %75 = vector.shape_cast %74 : vector<16xf32> to vector<16x1xf32>
    %cst_43 = arith.constant 1.280000e+02 : f32
    %76 = vector.broadcast %cst_43 : f32 to vector<16x1xf32>
    %77 = arith.divf %75, %76 : vector<16x1xf32>
    %cst_44 = arith.constant 9.99999974E-6 : f32
    %78 = vector.broadcast %cst_44 : f32 to vector<16x1xf32>
    %79 = arith.addf %77, %78 : vector<16x1xf32>
    %80 = math.rsqrt %79 : vector<16x1xf32>
    %81 = vector.broadcast %80 : vector<16x1xf32> to vector<16x128xf32>
    %82 = arith.mulf %72, %81 : vector<16x128xf32>
    %83 = vector.broadcast %10 : vector<1x128xf32> to vector<16x128xf32>
    %84 = arith.mulf %82, %83 : vector<16x128xf32>
    %85 = vector.broadcast %11 : vector<1x128xf32> to vector<16x128xf32>
    %86 = arith.addf %84, %85 : vector<16x128xf32>
    %87 = arith.truncf %86 : vector<16x128xf32> to vector<16x128xbf16>
    %cst_45 = arith.constant dense<0.000000e+00> : vector<16x256xf32>
    %88 = tpu.matmul %87, %12, %cst_45 {dimension_numbers = #tpu.dot_dimension_numbers<[1], [0], [0], [1], [0, 0, 1, 1], [], []>} : vector<16x128xbf16>, vector<128x256xbf16>, vector<16x256xf32> -> vector<16x256xf32>
    %89 = vector.broadcast %13 : vector<1x256xf32> to vector<16x256xf32>
    %90 = arith.addf %88, %89 : vector<16x256xf32>
    %91 = arith.mulf %90, %90 : vector<16x256xf32>
    %92 = arith.mulf %90, %91 : vector<16x256xf32>
    %cst_46 = arith.constant 4.471500e-02 : f32
    %93 = vector.broadcast %cst_46 : f32 to vector<16x256xf32>
    %94 = arith.mulf %93, %92 : vector<16x256xf32>
    %95 = arith.addf %90, %94 : vector<16x256xf32>
    %cst_47 = arith.constant 0.797884583 : f32
    %96 = vector.broadcast %cst_47 : f32 to vector<16x256xf32>
    %97 = arith.mulf %96, %95 : vector<16x256xf32>
    %98 = math.tanh %97 : vector<16x256xf32>
    %cst_48 = arith.constant 1.000000e+00 : f32
    %99 = vector.broadcast %cst_48 : f32 to vector<16x256xf32>
    %100 = arith.addf %99, %98 : vector<16x256xf32>
    %cst_49 = arith.constant 5.000000e-01 : f32
    %101 = vector.broadcast %cst_49 : f32 to vector<16x256xf32>
    %102 = arith.mulf %101, %100 : vector<16x256xf32>
    %103 = arith.mulf %90, %102 : vector<16x256xf32>
    %104 = arith.truncf %103 : vector<16x256xf32> to vector<16x256xbf16>
    %cst_50 = arith.constant dense<0.000000e+00> : vector<16x128xf32>
    %105 = tpu.matmul %104, %14, %cst_50 {dimension_numbers = #tpu.dot_dimension_numbers<[1], [0], [0], [1], [0, 0, 1, 1], [], []>} : vector<16x256xbf16>, vector<256x128xbf16>, vector<16x128xf32> -> vector<16x128xf32>
    %106 = vector.broadcast %15 : vector<1x128xf32> to vector<16x128xf32>
    %107 = arith.addf %105, %106 : vector<16x128xf32>
    %108 = arith.addf %66, %107 : vector<16x128xf32>
    %c0_51 = arith.constant 0 : index
    %c0_52 = arith.constant 0 : index
    %c0_53 = arith.constant 0 : index
    %109 = vector.load %arg3[%c0_51, %c0_52, %c0_53] : memref<1x16x1xf32, #tpu.memory_space<vmem>>, vector<1x16x1xf32>
    %110 = vector.shape_cast %109 : vector<1x16x1xf32> to vector<16x1xf32>
    %111 = vector.broadcast %110 : vector<16x1xf32> to vector<16x128xf32>
    %112 = arith.mulf %108, %111 : vector<16x128xf32>
    %cst_54 = arith.constant dense<0.000000e+00> : vector<128xf32>
    %113 = vector.multi_reduction <add>, %112, %cst_54 [0] : vector<16x128xf32> to vector<128xf32>
    %114 = vector.shape_cast %113 : vector<128xf32> to vector<1x128xf32>
    %c0_55 = arith.constant 0 : index
    %c0_56 = arith.constant 0 : index
    %c0_57 = arith.constant 0 : index
    %115 = vector.load %arg16[%c0_55, %c0_56, %c0_57] : memref<1x1x128xf32, #tpu.memory_space<vmem>>, vector<1x1x128xf32>
    %116 = vector.shape_cast %115 : vector<1x1x128xf32> to vector<1x128xf32>
    %117 = vector.shape_cast %114 : vector<1x128xf32> to vector<1x1x128xf32>
    tpu.vector_store %arg16[%c0_55, %c0_56, %c0_57], %117 {strides = array<i32>} : memref<1x1x128xf32, #tpu.memory_space<vmem>>, vector<1x1x128xf32>,
    return
  }
  func.func @transform_0(%arg0: i32) -> (i32, i32, i32) {
    %c0_i32 = arith.constant 0 : i32
    %c0_i32_0 = arith.constant 0 : i32
    %c0_i32_1 = arith.constant 0 : i32
    return %arg0, %c0_i32, %c0_i32_0 : i32, i32, i32
  }
  func.func @transform_1(%arg0: i32) -> (i32, i32, i32) {
    %c0_i32 = arith.constant 0 : i32
    %c0_i32_0 = arith.constant 0 : i32
    %c0_i32_1 = arith.constant 0 : i32
    return %arg0, %c0_i32, %c0_i32_0 : i32, i32, i32
  }
  func.func @transform_2(%arg0: i32) -> (i32, i32, i32) {
    %c0_i32 = arith.constant 0 : i32
    %c0_i32_0 = arith.constant 0 : i32
    %c0_i32_1 = arith.constant 0 : i32
    return %arg0, %c0_i32, %c0_i32_0 : i32, i32, i32
  }
  func.func @transform_3(%arg0: i32) -> (i32, i32) {
    %c0_i32 = arith.constant 0 : i32
    %c0_i32_0 = arith.constant 0 : i32
    %c0_i32_1 = arith.constant 0 : i32
    return %c0_i32, %c0_i32_0 : i32, i32
  }
  func.func @transform_4(%arg0: i32) -> (i32, i32) {
    %c0_i32 = arith.constant 0 : i32
    %c0_i32_0 = arith.constant 0 : i32
    %c0_i32_1 = arith.constant 0 : i32
    return %c0_i32, %c0_i32_0 : i32, i32
  }
  func.func @transform_5(%arg0: i32) -> (i32, i32) {
    %c0_i32 = arith.constant 0 : i32
    %c0_i32_0 = arith.constant 0 : i32
    %c0_i32_1 = arith.constant 0 : i32
    return %c0_i32, %c0_i32_0 : i32, i32
  }
  func.func @transform_6(%arg0: i32) -> (i32, i32) {
    %c0_i32 = arith.constant 0 : i32
    %c0_i32_0 = arith.constant 0 : i32
    %c0_i32_1 = arith.constant 0 : i32
    return %c0_i32, %c0_i32_0 : i32, i32
  }
  func.func @transform_7(%arg0: i32) -> (i32, i32) {
    %c0_i32 = arith.constant 0 : i32
    %c0_i32_0 = arith.constant 0 : i32
    %c0_i32_1 = arith.constant 0 : i32
    return %c0_i32, %c0_i32_0 : i32, i32
  }
  func.func @transform_8(%arg0: i32) -> (i32, i32) {
    %c0_i32 = arith.constant 0 : i32
    %c0_i32_0 = arith.constant 0 : i32
    %c0_i32_1 = arith.constant 0 : i32
    return %c0_i32, %c0_i32_0 : i32, i32
  }
  func.func @transform_9(%arg0: i32) -> (i32, i32) {
    %c0_i32 = arith.constant 0 : i32
    %c0_i32_0 = arith.constant 0 : i32
    %c0_i32_1 = arith.constant 0 : i32
    return %c0_i32, %c0_i32_0 : i32, i32
  }
  func.func @transform_10(%arg0: i32) -> (i32, i32) {
    %c0_i32 = arith.constant 0 : i32
    %c0_i32_0 = arith.constant 0 : i32
    %c0_i32_1 = arith.constant 0 : i32
    return %c0_i32, %c0_i32_0 : i32, i32
  }
  func.func @transform_11(%arg0: i32) -> (i32, i32) {
    %c0_i32 = arith.constant 0 : i32
    %c0_i32_0 = arith.constant 0 : i32
    %c0_i32_1 = arith.constant 0 : i32
    return %c0_i32, %c0_i32_0 : i32, i32
  }
  func.func @transform_12(%arg0: i32) -> (i32, i32) {
    %c0_i32 = arith.constant 0 : i32
    %c0_i32_0 = arith.constant 0 : i32
    %c0_i32_1 = arith.constant 0 : i32
    return %c0_i32, %c0_i32_0 : i32, i32
  }
  func.func @transform_13(%arg0: i32) -> (i32, i32) {
    %c0_i32 = arith.constant 0 : i32
    %c0_i32_0 = arith.constant 0 : i32
    %c0_i32_1 = arith.constant 0 : i32
    return %c0_i32, %c0_i32_0 : i32, i32
  }
  func.func @transform_14(%arg0: i32) -> (i32, i32) {
    %c0_i32 = arith.constant 0 : i32
    %c0_i32_0 = arith.constant 0 : i32
    %c0_i32_1 = arith.constant 0 : i32
    return %c0_i32, %c0_i32_0 : i32, i32
  }
  func.func @transform_15(%arg0: i32) -> (i32, i32, i32) {
    %c0_i32 = arith.constant 0 : i32
    %c0_i32_0 = arith.constant 0 : i32
    %c0_i32_1 = arith.constant 0 : i32
    return %arg0, %c0_i32, %c0_i32_0 : i32, i32, i32
  }
}

</mosaic_0001>

<llo_original>
// kernel: tpu_custom_call.1
$region0: #{tpu_custom_call.1}
  #allocation0 [shape = 'u32[]', space=smem, size = 0x4, offset = 0x4, fixed_abs, tag = 'smem constant byte address 0x4 - core index']
  #allocation1 [shape = 'u32[144,128]{1,0:T(1,128)}', space=vmem, size = 0x12000, scoped, tag = 'internal scratch']
  %s0 = inlined_call_operand.vmem [shape: f32[8,16,128], index: 0, kind: input, shape index: {}]
  %s1 = inlined_call_operand.vmem [shape: f32[8,1,16], index: 1, kind: input, shape index: {}]
  %s2 = inlined_call_operand.vmem [shape: f32[8,16,1], index: 2, kind: input, shape index: {}]
  %s3 = inlined_call_operand.hbm [shape: f32[1,128], index: 3, kind: input, shape index: {}]
  %s4 = inlined_call_operand.vmem [shape: f32[1,128], index: 4, kind: input, shape index: {}]
  %s5 = inlined_call_operand.hbm [shape: bf16[128,384], index: 5, kind: input, shape index: {}]
  %s6 = inlined_call_operand.vmem [shape: f32[1,384], index: 6, kind: input, shape index: {}]
  %s7 = inlined_call_operand.hbm [shape: bf16[128,128], index: 7, kind: input, shape index: {}]
  %s8 = inlined_call_operand.vmem [shape: f32[1,128], index: 8, kind: input, shape index: {}]
  %s9 = inlined_call_operand.vmem [shape: f32[1,128], index: 9, kind: input, shape index: {}]
  %s10 = inlined_call_operand.vmem [shape: f32[1,128], index: 10, kind: input, shape index: {}]
  %s11 = inlined_call_operand.hbm [shape: bf16[128,256], index: 11, kind: input, shape index: {}]
  %s12 = inlined_call_operand.vmem [shape: f32[1,256], index: 12, kind: input, shape index: {}]
  %s13 = inlined_call_operand.hbm [shape: bf16[256,128], index: 13, kind: input, shape index: {}]
  %s14 = inlined_call_operand.vmem [shape: f32[1,128], index: 14, kind: input, shape index: {}]
  %s15 = inlined_call_operand.hbm [shape: f32[8,1,128], index: 15, kind: output, shape index: {}]
  %s16 = sld [smem:[#allocation0]]
  $region113: #{tpu_custom_call.1} parent=0
    _
  %s18 = ssub.s32 1, %s16
  %s19 = scalar_select 0, %s18, %s16
  $region1: #{tpu_custom_call.1} parent=0
    #allocation2 [shape = 'u8[512]{0}', space=vmem, size = 0x400, scoped, tag = 'input window, operand 3, single buffered']
    #allocation3 [shape = 's32[2]{0}', space=sflag, size = 0x8, scoped, tag = 'scoped memory for tpu_custom_call.1']
    #allocation4 [shape = 's32[2]{0}', space=sflag, size = 0x8, scoped, tag = 'scoped memory for tpu_custom_call.1']
    #allocation5 [shape = 'u8[98304]{0}', space=vmem, size = 0x18000, scoped, tag = 'input window, operand 5, single buffered']
    #allocation6 [shape = 's32[1]{0}', space=sflag, size = 0x4, scoped, tag = 'scoped memory for tpu_custom_call.1']
    #allocation7 [shape = 'u8[32768]{0}', space=vmem, size = 0x8000, scoped, tag = 'input window, operand 7, single buffered']
    #allocation8 [shape = 'u8[65536]{0}', space=vmem, size = 0x10000, scoped, tag = 'input window, operand 11, single buffered']
    #allocation9 [shape = 's32[1]{0}', space=sflag, size = 0x4, scoped, tag = 'scoped memory for tpu_custom_call.1']
    #allocation10 [shape = 'u8[65536]{0}', space=vmem, size = 0x10000, scoped, tag = 'input window, operand 13, single buffered']
    #allocation11 [shape = 'u8[1024]{0}', space=vmem, size = 0x400, scoped, tag = 'output window, operand 0']
    %20 = vsyncpa [#allocation3], 0
    %21 = vsyncpa [#allocation6], 0
    %22 = vsyncpa [#allocation9], 0
    %23 = vsyncpa [#allocation4], 0
    %s24 = scalar_lea.sflag [#allocation4], 1
    %25 = vsyncpa %s24, 0
    loop: start=0, step=1, limit=10
    $region2: #{tpu_custom_call.1} parent=1 // loop_pre_header
      _
    $region3: #{tpu_custom_call.1} parent=1 // loop_header
      %s27 = sphi 0, %s31
      %p28 = scmp.ge.s32.totalorder %s27, 10
      %s37 = sphi 0, %s39
      %s40 = sphi 0, %s37
      %s41 = sphi 0, %s40
      %s57 = sphi 0, %s41
      %s63 = sphi 0, %s65
      %s66 = sphi 0, %s63
      %s67 = sphi 0, %s66
      %s83 = sphi 0, %s67
      %s89 = sphi 0, %s91
      %s92 = sphi 0, %s89
      %s93 = sphi 0, %s92
      %s109 = sphi 0, %s93
      %s113 = sphi 0, %s113
      %s115 = sphi 0, %s113
      %s116 = sphi 0, %s115
      %s130 = sphi 0, %s116
      %s134 = sphi 0, %s134
      %s136 = sphi 0, %s134
      %s137 = sphi 0, %s136
      %s151 = sphi 0, %s137
      %s155 = sphi 0, %s155
      %s157 = sphi 0, %s155
      %s158 = sphi 0, %s157
      %s172 = sphi 0, %s158
      %s176 = sphi 0, %s176
      %s178 = sphi 0, %s176
      %s179 = sphi 0, %s178
      %s193 = sphi 0, %s179
      %s197 = sphi 0, %s197
      %s199 = sphi 0, %s197
      %s200 = sphi 0, %s199
      %s214 = sphi 0, %s200
      %s218 = sphi 0, %s218
      %s220 = sphi 0, %s218
      %s221 = sphi 0, %s220
      %s235 = sphi 0, %s221
      %s239 = sphi 0, %s239
      %s241 = sphi 0, %s239
      %s242 = sphi 0, %s241
      %s256 = sphi 0, %s242
      %s260 = sphi 0, %s260
      %s262 = sphi 0, %s260
      %s263 = sphi 0, %s262
      %s277 = sphi 0, %s263
      %s281 = sphi 0, %s281
      %s283 = sphi 0, %s281
      %s284 = sphi 0, %s283
      %s298 = sphi 0, %s284
      %s302 = sphi 0, %s302
      %s304 = sphi 0, %s302
      %s305 = sphi 0, %s304
      %s319 = sphi 0, %s305
      %s323 = sphi 0, %s323
      %s325 = sphi 0, %s323
      %s326 = sphi 0, %s325
      %s340 = sphi 0, %s326
      %s344 = sphi 0, %s344
      %s346 = sphi 0, %s344
      %s347 = sphi 0, %s346
      %s361 = sphi 0, %s347
      %s367 = sphi 0, %s369
      %s370 = sphi 0, %s367
      %s371 = sphi 0, %s370
      %s387 = sphi 0, %s371
    $region4: #{tpu_custom_call.1} parent=1 // loop_header_branch
      %30 = sbr.rel (%p28) target = $region8
    $region5: #{tpu_custom_call.1} parent=1 // loop_body
      %s32 = ssub.s32 %s27, 1
      %s33 = ssub.s32 %s27, 2
      %s34 = sadd.s32 %s27, 1
      %s35 = ssub.s32 %s27, %s34
      %p36 = scmp.eq.s32.totalorder %s35, 0
      %s38 = sadd.s32 %s37, 1
      %s39 = scalar_select %p36, %s37, %s38
      %p42 = pneg %p36
      %p43 = scmp.eq.s32.totalorder %s27, 7
      %p44 = por %p42, %p43
      %p45 = scmp.ne.s32.totalorder %s37, %s40
      %p46 = scmp.eq.s32.totalorder %s27, 0
      %p47 = por %p45, %p46
      %p48 = scmp.ne.s32.totalorder %s37, %s40
      %p49 = scmp.eq.s32.totalorder %s32, 7
      %p50 = por %p48, %p49
      %p51 = scmp.ne.s32.totalorder %s40, %s41
      %p52 = scmp.eq.s32.totalorder %s32, 0
      %p53 = por %p51, %p52
      %p54 = scmp.ne.s32.totalorder %s40, %s41
      %p55 = scmp.eq.s32.totalorder %s33, 7
      %p56 = por %p54, %p55
      %p58 = scmp.ne.s32.totalorder %s41, %s57
      %p59 = scmp.eq.s32.totalorder %s33, 0
      %p60 = por %p58, %p59
      %s61 = ssub.s32 %s27, %s34
      %p62 = scmp.eq.s32.totalorder %s61, 0
      %s64 = sadd.s32 %s63, 1
      %s65 = scalar_select %p62, %s63, %s64
      %p68 = pneg %p62
      %p69 = scmp.eq.s32.totalorder %s27, 7
      %p70 = por %p68, %p69
      %p71 = scmp.ne.s32.totalorder %s63, %s66
      %p72 = scmp.eq.s32.totalorder %s27, 0
      %p73 = por %p71, %p72
      %p74 = scmp.ne.s32.totalorder %s63, %s66
      %p75 = scmp.eq.s32.totalorder %s32, 7
      %p76 = por %p74, %p75
      %p77 = scmp.ne.s32.totalorder %s66, %s67
      %p78 = scmp.eq.s32.totalorder %s32, 0
      %p79 = por %p77, %p78
      %p80 = scmp.ne.s32.totalorder %s66, %s67
      %p81 = scmp.eq.s32.totalorder %s33, 7
      %p82 = por %p80, %p81
      %p84 = scmp.ne.s32.totalorder %s67, %s83
      %p85 = scmp.eq.s32.totalorder %s33, 0
      %p86 = por %p84, %p85
      %s87 = ssub.s32 %s27, %s34
      %p88 = scmp.eq.s32.totalorder %s87, 0
      %s90 = sadd.s32 %s89, 1
      %s91 = scalar_select %p88, %s89, %s90
      %p94 = pneg %p88
      %p95 = scmp.eq.s32.totalorder %s27, 7
      %p96 = por %p94, %p95
      %p97 = scmp.ne.s32.totalorder %s89, %s92
      %p98 = scmp.eq.s32.totalorder %s27, 0
      %p99 = por %p97, %p98
      %p100 = scmp.ne.s32.totalorder %s89, %s92
      %p101 = scmp.eq.s32.totalorder %s32, 7
      %p102 = por %p100, %p101
      %p103 = scmp.ne.s32.totalorder %s92, %s93
      %p104 = scmp.eq.s32.totalorder %s32, 0
      %p105 = por %p103, %p104
      %p106 = scmp.ne.s32.totalorder %s92, %s93
      %p107 = scmp.eq.s32.totalorder %s33, 7
      %p108 = por %p106, %p107
      %p110 = scmp.ne.s32.totalorder %s93, %s109
      %p111 = scmp.eq.s32.totalorder %s33, 0
      %p112 = por %p110, %p111
      %s114 = sadd.s32 %s113, 1
      %p117 = scmp.eq.s32.totalorder %s27, 7
      %p118 = scmp.ne.s32.totalorder %s113, %s115
      %p119 = scmp.eq.s32.totalorder %s27, 0
      %p120 = por %p118, %p119
      %p121 = scmp.ne.s32.totalorder %s113, %s115
      %p122 = scmp.eq.s32.totalorder %s32, 7
      %p123 = por %p121, %p122
      %p124 = scmp.ne.s32.totalorder %s115, %s116
      %p125 = scmp.eq.s32.totalorder %s32, 0
      %p126 = por %p124, %p125
      %p127 = scmp.ne.s32.totalorder %s115, %s116
      %p128 = scmp.eq.s32.totalorder %s33, 7
      %p129 = por %p127, %p128
      %p131 = scmp.ne.s32.totalorder %s116, %s130
      %p132 = scmp.eq.s32.totalorder %s33, 0
      %p133 = por %p131, %p132
      %s135 = sadd.s32 %s134, 1
      %p138 = scmp.eq.s32.totalorder %s27, 7
      %p139 = scmp.ne.s32.totalorder %s134, %s136
      %p140 = scmp.eq.s32.totalorder %s27, 0
      %p141 = por %p139, %p140
      %p142 = scmp.ne.s32.totalorder %s134, %s136
      %p143 = scmp.eq.s32.totalorder %s32, 7
      %p144 = por %p142, %p143
      %p145 = scmp.ne.s32.totalorder %s136, %s137
      %p146 = scmp.eq.s32.totalorder %s32, 0
      %p147 = por %p145, %p146
      %p148 = scmp.ne.s32.totalorder %s136, %s137
      %p149 = scmp.eq.s32.totalorder %s33, 7
      %p150 = por %p148, %p149
      %p152 = scmp.ne.s32.totalorder %s137, %s151
      %p153 = scmp.eq.s32.totalorder %s33, 0
      %p154 = por %p152, %p153
      %s156 = sadd.s32 %s155, 1
      %p159 = scmp.eq.s32.totalorder %s27, 7
      %p160 = scmp.ne.s32.totalorder %s155, %s157
      %p161 = scmp.eq.s32.totalorder %s27, 0
      %p162 = por %p160, %p161
      %p163 = scmp.ne.s32.totalorder %s155, %s157
      %p164 = scmp.eq.s32.totalorder %s32, 7
      %p165 = por %p163, %p164
      %p166 = scmp.ne.s32.totalorder %s157, %s158
      %p167 = scmp.eq.s32.totalorder %s32, 0
      %p168 = por %p166, %p167
      %p169 = scmp.ne.s32.totalorder %s157, %s158
      %p170 = scmp.eq.s32.totalorder %s33, 7
      %p171 = por %p169, %p170
      %p173 = scmp.ne.s32.totalorder %s158, %s172
      %p174 = scmp.eq.s32.totalorder %s33, 0
      %p175 = por %p173, %p174
      %s177 = sadd.s32 %s176, 1
      %p180 = scmp.eq.s32.totalorder %s27, 7
      %p181 = scmp.ne.s32.totalorder %s176, %s178
      %p182 = scmp.eq.s32.totalorder %s27, 0
      %p183 = por %p181, %p182
      %p184 = scmp.ne.s32.totalorder %s176, %s178
      %p185 = scmp.eq.s32.totalorder %s32, 7
      %p186 = por %p184, %p185
      %p187 = scmp.ne.s32.totalorder %s178, %s179
      %p188 = scmp.eq.s32.totalorder %s32, 0
      %p189 = por %p187, %p188
      %p190 = scmp.ne.s32.totalorder %s178, %s179
      %p191 = scmp.eq.s32.totalorder %s33, 7
      %p192 = por %p190, %p191
      %p194 = scmp.ne.s32.totalorder %s179, %s193
      %p195 = scmp.eq.s32.totalorder %s33, 0
      %p196 = por %p194, %p195
      %s198 = sadd.s32 %s197, 1
      %p201 = scmp.eq.s32.totalorder %s27, 7
      %p202 = scmp.ne.s32.totalorder %s197, %s199
      %p203 = scmp.eq.s32.totalorder %s27, 0
      %p204 = por %p202, %p203
      %p205 = scmp.ne.s32.totalorder %s197, %s199
      %p206 = scmp.eq.s32.totalorder %s32, 7
      %p207 = por %p205, %p206
      %p208 = scmp.ne.s32.totalorder %s199, %s200
      %p209 = scmp.eq.s32.totalorder %s32, 0
      %p210 = por %p208, %p209
      %p211 = scmp.ne.s32.totalorder %s199, %s200
      %p212 = scmp.eq.s32.totalorder %s33, 7
      %p213 = por %p211, %p212
      %p215 = scmp.ne.s32.totalorder %s200, %s214
      %p216 = scmp.eq.s32.totalorder %s33, 0
      %p217 = por %p215, %p216
      %s219 = sadd.s32 %s218, 1
      %p222 = scmp.eq.s32.totalorder %s27, 7
      %p223 = scmp.ne.s32.totalorder %s218, %s220
      %p224 = scmp.eq.s32.totalorder %s27, 0
      %p225 = por %p223, %p224
      %p226 = scmp.ne.s32.totalorder %s218, %s220
      %p227 = scmp.eq.s32.totalorder %s32, 7
      %p228 = por %p226, %p227
      %p229 = scmp.ne.s32.totalorder %s220, %s221
      %p230 = scmp.eq.s32.totalorder %s32, 0
      %p231 = por %p229, %p230
      %p232 = scmp.ne.s32.totalorder %s220, %s221
      %p233 = scmp.eq.s32.totalorder %s33, 7
      %p234 = por %p232, %p233
      %p236 = scmp.ne.s32.totalorder %s221, %s235
      %p237 = scmp.eq.s32.totalorder %s33, 0
      %p238 = por %p236, %p237
      %s240 = sadd.s32 %s239, 1
      %p243 = scmp.eq.s32.totalorder %s27, 7
      %p244 = scmp.ne.s32.totalorder %s239, %s241
      %p245 = scmp.eq.s32.totalorder %s27, 0
      %p246 = por %p244, %p245
      %p247 = scmp.ne.s32.totalorder %s239, %s241
      %p248 = scmp.eq.s32.totalorder %s32, 7
      %p249 = por %p247, %p248
      %p250 = scmp.ne.s32.totalorder %s241, %s242
      %p251 = scmp.eq.s32.totalorder %s32, 0
      %p252 = por %p250, %p251
      %p253 = scmp.ne.s32.totalorder %s241, %s242
      %p254 = scmp.eq.s32.totalorder %s33, 7
      %p255 = por %p253, %p254
      %p257 = scmp.ne.s32.totalorder %s242, %s256
      %p258 = scmp.eq.s32.totalorder %s33, 0
      %p259 = por %p257, %p258
      %s261 = sadd.s32 %s260, 1
      %p264 = scmp.eq.s32.totalorder %s27, 7
      %p265 = scmp.ne.s32.totalorder %s260, %s262
      %p266 = scmp.eq.s32.totalorder %s27, 0
      %p267 = por %p265, %p266
      %p268 = scmp.ne.s32.totalorder %s260, %s262
      %p269 = scmp.eq.s32.totalorder %s32, 7
      %p270 = por %p268, %p269
      %p271 = scmp.ne.s32.totalorder %s262, %s263
      %p272 = scmp.eq.s32.totalorder %s32, 0
      %p273 = por %p271, %p272
      %p274 = scmp.ne.s32.totalorder %s262, %s263
      %p275 = scmp.eq.s32.totalorder %s33, 7
      %p276 = por %p274, %p275
      %p278 = scmp.ne.s32.totalorder %s263, %s277
      %p279 = scmp.eq.s32.totalorder %s33, 0
      %p280 = por %p278, %p279
      %s282 = sadd.s32 %s281, 1
      %p285 = scmp.eq.s32.totalorder %s27, 7
      %p286 = scmp.ne.s32.totalorder %s281, %s283
      %p287 = scmp.eq.s32.totalorder %s27, 0
      %p288 = por %p286, %p287
      %p289 = scmp.ne.s32.totalorder %s281, %s283
      %p290 = scmp.eq.s32.totalorder %s32, 7
      %p291 = por %p289, %p290
      %p292 = scmp.ne.s32.totalorder %s283, %s284
      %p293 = scmp.eq.s32.totalorder %s32, 0
      %p294 = por %p292, %p293
      %p295 = scmp.ne.s32.totalorder %s283, %s284
      %p296 = scmp.eq.s32.totalorder %s33, 7
      %p297 = por %p295, %p296
      %p299 = scmp.ne.s32.totalorder %s284, %s298
      %p300 = scmp.eq.s32.totalorder %s33, 0
      %p301 = por %p299, %p300
      %s303 = sadd.s32 %s302, 1
      %p306 = scmp.eq.s32.totalorder %s27, 7
      %p307 = scmp.ne.s32.totalorder %s302, %s304
      %p308 = scmp.eq.s32.totalorder %s27, 0
      %p309 = por %p307, %p308
      %p310 = scmp.ne.s32.totalorder %s302, %s304
      %p311 = scmp.eq.s32.totalorder %s32, 7
      %p312 = por %p310, %p311
      %p313 = scmp.ne.s32.totalorder %s304, %s305
      %p314 = scmp.eq.s32.totalorder %s32, 0
      %p315 = por %p313, %p314
      %p316 = scmp.ne.s32.totalorder %s304, %s305
      %p317 = scmp.eq.s32.totalorder %s33, 7
      %p318 = por %p316, %p317
      %p320 = scmp.ne.s32.totalorder %s305, %s319
      %p321 = scmp.eq.s32.totalorder %s33, 0
      %p322 = por %p320, %p321
      %s324 = sadd.s32 %s323, 1
      %p327 = scmp.eq.s32.totalorder %s27, 7
      %p328 = scmp.ne.s32.totalorder %s323, %s325
      %p329 = scmp.eq.s32.totalorder %s27, 0
      %p330 = por %p328, %p329
      %p331 = scmp.ne.s32.totalorder %s323, %s325
      %p332 = scmp.eq.s32.totalorder %s32, 7
      %p333 = por %p331, %p332
      %p334 = scmp.ne.s32.totalorder %s325, %s326
      %p335 = scmp.eq.s32.totalorder %s32, 0
      %p336 = por %p334, %p335
      %p337 = scmp.ne.s32.totalorder %s325, %s326
      %p338 = scmp.eq.s32.totalorder %s33, 7
      %p339 = por %p337, %p338
      %p341 = scmp.ne.s32.totalorder %s326, %s340
      %p342 = scmp.eq.s32.totalorder %s33, 0
      %p343 = por %p341, %p342
      %s345 = sadd.s32 %s344, 1
      %p348 = scmp.eq.s32.totalorder %s27, 7
      %p349 = scmp.ne.s32.totalorder %s344, %s346
      %p350 = scmp.eq.s32.totalorder %s27, 0
      %p351 = por %p349, %p350
      %p352 = scmp.ne.s32.totalorder %s344, %s346
      %p353 = scmp.eq.s32.totalorder %s32, 7
      %p354 = por %p352, %p353
      %p355 = scmp.ne.s32.totalorder %s346, %s347
      %p356 = scmp.eq.s32.totalorder %s32, 0
      %p357 = por %p355, %p356
      %p358 = scmp.ne.s32.totalorder %s346, %s347
      %p359 = scmp.eq.s32.totalorder %s33, 7
      %p360 = por %p358, %p359
      %p362 = scmp.ne.s32.totalorder %s347, %s361
      %p363 = scmp.eq.s32.totalorder %s33, 0
      %p364 = por %p362, %p363
      %s365 = ssub.s32 %s27, %s34
      %p366 = scmp.eq.s32.totalorder %s365, 0
      %s368 = sadd.s32 %s367, 1
      %s369 = scalar_select %p366, %s367, %s368
      %p372 = pneg %p366
      %p373 = scmp.eq.s32.totalorder %s27, 7
      %p374 = por %p372, %p373
      %p375 = scmp.ne.s32.totalorder %s367, %s370
      %p376 = scmp.eq.s32.totalorder %s27, 0
      %p377 = por %p375, %p376
      %p378 = scmp.ne.s32.totalorder %s367, %s370
      %p379 = scmp.eq.s32.totalorder %s32, 7
      %p380 = por %p378, %p379
      %p381 = scmp.ne.s32.totalorder %s370, %s371
      %p382 = scmp.eq.s32.totalorder %s32, 0
      %p383 = por %p381, %p382
      %p384 = scmp.ne.s32.totalorder %s370, %s371
      %p385 = scmp.eq.s32.totalorder %s33, 7
      %p386 = por %p384, %p385
      %p388 = scmp.ne.s32.totalorder %s371, %s387
      %p389 = scmp.eq.s32.totalorder %s33, 0
      %p390 = por %p388, %p389
      %p391 = scmp.le.s32.totalorder 1, %s27
      %p392 = scmp.lt.s32.totalorder %s27, 9
      %p393 = pnand %p391, %p392
      %p394 = pneg %p393
      // Predicated region
      $region9: #{tpu_custom_call.1} parent=5 // pred_check
        _
      $region10: #{tpu_custom_call.1} parent=5 // pred_check_branch
        %396 = sbr.rel (%p393) target = $region12
      $region11: #{tpu_custom_call.1} parent=5 // pred_region
        %s397 = ssub.s32 %s27, 1
        // Predicated region
        $region13: #{tpu_custom_call.1} parent=11 // pred_check
          %p398 = pneg %p126
        $region14: #{tpu_custom_call.1} parent=11 // pred_check_branch
          %400 = sbr.rel (%p398) target = $region16
        $region15: #{tpu_custom_call.1} parent=11 // pred_region
          %s402 = ssub.s32 16, 16
          %403 = vsyncadd [#allocation3], %s402
          %s405 = sshll.u32 [#allocation2], 4
          %s406 = int_to_ptr.vmem [resolvable:$true] %s405
          %408 = dma.hbm_to_vmem [thread:$0]  %s3, 16, %s406, [#allocation3]
        $region16: #{tpu_custom_call.1} parent=11 // pred_fallthru
          _
        // Predicated region
        $region17: #{tpu_custom_call.1} parent=11 // pred_check
          %p409 = pneg %p147
        $region18: #{tpu_custom_call.1} parent=11 // pred_check_branch
          %411 = sbr.rel (%p409) target = $region20
        $region19: #{tpu_custom_call.1} parent=11 // pred_region
          _
        $region20: #{tpu_custom_call.1} parent=11 // pred_fallthru
          _
        // Predicated region
        $region21: #{tpu_custom_call.1} parent=11 // pred_check
          %p412 = pneg %p168
        $region22: #{tpu_custom_call.1} parent=11 // pred_check_branch
          %414 = sbr.rel (%p412) target = $region24
        $region23: #{tpu_custom_call.1} parent=11 // pred_region
          %s416 = ssub.s32 3072, 3072
          %417 = vsyncadd [#allocation6], %s416
          %s418 = sshll.u32 [#allocation5], 4
          %s419 = int_to_ptr.vmem [resolvable:$true] %s418
          %424 = dma.hbm_to_vmem [thread:$0]  %s5, 3072, %s419, [#allocation6], 192, 192, 12
        $region24: #{tpu_custom_call.1} parent=11 // pred_fallthru
          _
        // Predicated region
        $region25: #{tpu_custom_call.1} parent=11 // pred_check
          %p425 = pneg %p189
        $region26: #{tpu_custom_call.1} parent=11 // pred_check_branch
          %427 = sbr.rel (%p425) target = $region28
        $region27: #{tpu_custom_call.1} parent=11 // pred_region
          _
        $region28: #{tpu_custom_call.1} parent=11 // pred_fallthru
          _
        // Predicated region
        $region29: #{tpu_custom_call.1} parent=11 // pred_check
          %p428 = pneg %p210
        $region30: #{tpu_custom_call.1} parent=11 // pred_check_branch
          %430 = sbr.rel (%p428) target = $region32
        $region31: #{tpu_custom_call.1} parent=11 // pred_region
          %s432 = ssub.s32 1024, 1024
          %433 = vsyncadd [#allocation6], %s432
          %s434 = sshll.u32 [#allocation7], 4
          %s435 = int_to_ptr.vmem [resolvable:$true] %s434
          %440 = dma.hbm_to_vmem [thread:$0]  %s7, 1024, %s435, [#allocation6], 64, 64, 4
        $region32: #{tpu_custom_call.1} parent=11 // pred_fallthru
          _
        // Predicated region
        $region33: #{tpu_custom_call.1} parent=11 // pred_check
          %p441 = pneg %p231
        $region34: #{tpu_custom_call.1} parent=11 // pred_check_branch
          %443 = sbr.rel (%p441) target = $region36
        $region35: #{tpu_custom_call.1} parent=11 // pred_region
          _
        $region36: #{tpu_custom_call.1} parent=11 // pred_fallthru
          _
        // Predicated region
        $region37: #{tpu_custom_call.1} parent=11 // pred_check
          %p444 = pneg %p252
        $region38: #{tpu_custom_call.1} parent=11 // pred_check_branch
          %446 = sbr.rel (%p444) target = $region40
        $region39: #{tpu_custom_call.1} parent=11 // pred_region
          _
        $region40: #{tpu_custom_call.1} parent=11 // pred_fallthru
          _
        // Predicated region
        $region41: #{tpu_custom_call.1} parent=11 // pred_check
          %p447 = pneg %p273
        $region42: #{tpu_custom_call.1} parent=11 // pred_check_branch
          %449 = sbr.rel (%p447) target = $region44
        $region43: #{tpu_custom_call.1} parent=11 // pred_region
          _
        $region44: #{tpu_custom_call.1} parent=11 // pred_fallthru
          _
        // Predicated region
        $region45: #{tpu_custom_call.1} parent=11 // pred_check
          %p450 = pneg %p294
        $region46: #{tpu_custom_call.1} parent=11 // pred_check_branch
          %452 = sbr.rel (%p450) target = $region48
        $region47: #{tpu_custom_call.1} parent=11 // pred_region
          %s454 = ssub.s32 2048, 2048
          %455 = vsyncadd [#allocation9], %s454
          %s456 = sshll.u32 [#allocation8], 4
          %s457 = int_to_ptr.vmem [resolvable:$true] %s456
          %462 = dma.hbm_to_vmem [thread:$0]  %s11, 2048, %s457, [#allocation9], 128, 128, 8
        $region48: #{tpu_custom_call.1} parent=11 // pred_fallthru
          _
        // Predicated region
        $region49: #{tpu_custom_call.1} parent=11 // pred_check
          %p463 = pneg %p315
        $region50: #{tpu_custom_call.1} parent=11 // pred_check_branch
          %465 = sbr.rel (%p463) target = $region52
        $region51: #{tpu_custom_call.1} parent=11 // pred_region
          _
        $region52: #{tpu_custom_call.1} parent=11 // pred_fallthru
          _
        // Predicated region
        $region53: #{tpu_custom_call.1} parent=11 // pred_check
          %p466 = pneg %p336
        $region54: #{tpu_custom_call.1} parent=11 // pred_check_branch
          %468 = sbr.rel (%p466) target = $region56
        $region55: #{tpu_custom_call.1} parent=11 // pred_region
          %s470 = ssub.s32 2048, 2048
          %471 = vsyncadd [#allocation9], %s470
          %s472 = sshll.u32 [#allocation10], 4
          %s473 = int_to_ptr.vmem [resolvable:$true] %s472
          %478 = dma.hbm_to_vmem [thread:$0]  %s13, 2048, %s473, [#allocation9], 64, 64, 4
        $region56: #{tpu_custom_call.1} parent=11 // pred_fallthru
          _
        // Predicated region
        $region57: #{tpu_custom_call.1} parent=11 // pred_check
          %p479 = pneg %p357
        $region58: #{tpu_custom_call.1} parent=11 // pred_check_branch
          %481 = sbr.rel (%p479) target = $region60
        $region59: #{tpu_custom_call.1} parent=11 // pred_region
          _
        $region60: #{tpu_custom_call.1} parent=11 // pred_fallthru
          _
      $region12: #{tpu_custom_call.1} parent=5 // pred_fallthru
        _
      %p482 = scmp.lt.s32.totalorder %s27, 8
      // Predicated region
      $region61: #{tpu_custom_call.1} parent=5 // pred_check
        %p483 = pneg %p482
      $region62: #{tpu_custom_call.1} parent=5 // pred_check_branch
        %485 = sbr.rel (%p483) target = $region64
      $region63: #{tpu_custom_call.1} parent=5 // pred_region
        // Predicated region
        $region65: #{tpu_custom_call.1} parent=63 // pred_check
          %p486 = pneg %p47
        $region66: #{tpu_custom_call.1} parent=63 // pred_check_branch
          %488 = sbr.rel (%p486) target = $region68
        $region67: #{tpu_custom_call.1} parent=63 // pred_region
          %p489 = scmp.lt.s32.totalorder %s27, 7
          %s490 = scalar_select %p489, %s27, 7
          %s491 = smul.addr %s490, 2
          %s492 = smul.addr %s491, 8
          %s493 = scalar_lea.vmem %s0, %s492
        $region68: #{tpu_custom_call.1} parent=63 // pred_fallthru
          _
        // Predicated region
        $region69: #{tpu_custom_call.1} parent=63 // pred_check
          %p494 = pneg %p73
        $region70: #{tpu_custom_call.1} parent=63 // pred_check_branch
          %496 = sbr.rel (%p494) target = $region72
        $region71: #{tpu_custom_call.1} parent=63 // pred_region
          %p497 = scmp.lt.s32.totalorder %s27, 7
          %s498 = scalar_select %p497, %s27, 7
          %s499 = scalar_lea.vmem %s1, %s498
        $region72: #{tpu_custom_call.1} parent=63 // pred_fallthru
          _
        // Predicated region
        $region73: #{tpu_custom_call.1} parent=63 // pred_check
          %p500 = pneg %p99
        $region74: #{tpu_custom_call.1} parent=63 // pred_check_branch
          %502 = sbr.rel (%p500) target = $region76
        $region75: #{tpu_custom_call.1} parent=63 // pred_region
          %p503 = scmp.lt.s32.totalorder %s27, 7
          %s504 = scalar_select %p503, %s27, 7
          %s505 = smul.addr %s504, 2
          %s506 = smul.addr %s505, 8
          %s507 = scalar_lea.vmem %s2, %s506
        $region76: #{tpu_custom_call.1} parent=63 // pred_fallthru
          _
      $region64: #{tpu_custom_call.1} parent=5 // pred_fallthru
        _
      %p508 = scmp.le.s32.totalorder 1, %s27
      %p509 = scmp.lt.s32.totalorder %s27, 9
      %p510 = pnand %p508, %p509
      %p511 = pneg %p510
      // Predicated region
      $region77: #{tpu_custom_call.1} parent=5 // pred_check
        _
      $region78: #{tpu_custom_call.1} parent=5 // pred_check_branch
        %513 = sbr.rel (%p510) target = $region80
      $region79: #{tpu_custom_call.1} parent=5 // pred_region
        %s514 = ssub.s32 %s27, 1
        // Predicated region
        $region81: #{tpu_custom_call.1} parent=79 // pred_check
          %p515 = pneg %p126
        $region82: #{tpu_custom_call.1} parent=79 // pred_check_branch
          %517 = sbr.rel (%p515) target = $region84
        $region83: #{tpu_custom_call.1} parent=79 // pred_region
          %518 = dma.done [#allocation3], 16
        $region84: #{tpu_custom_call.1} parent=79 // pred_fallthru
          _
        // Predicated region
        $region85: #{tpu_custom_call.1} parent=79 // pred_check
          %p519 = pneg %p168
        $region86: #{tpu_custom_call.1} parent=79 // pred_check_branch
          %521 = sbr.rel (%p519) target = $region88
        $region87: #{tpu_custom_call.1} parent=79 // pred_region
          %522 = dma.done [#allocation6], 3072
        $region88: #{tpu_custom_call.1} parent=79 // pred_fallthru
          _
        // Predicated region
        $region89: #{tpu_custom_call.1} parent=79 // pred_check
          %p523 = pneg %p210
        $region90: #{tpu_custom_call.1} parent=79 // pred_check_branch
          %525 = sbr.rel (%p523) target = $region92
        $region91: #{tpu_custom_call.1} parent=79 // pred_region
          %526 = dma.done [#allocation6], 1024
        $region92: #{tpu_custom_call.1} parent=79 // pred_fallthru
          _
        // Predicated region
        $region93: #{tpu_custom_call.1} parent=79 // pred_check
          %p527 = pneg %p294
        $region94: #{tpu_custom_call.1} parent=79 // pred_check_branch
          %529 = sbr.rel (%p527) target = $region96
        $region95: #{tpu_custom_call.1} parent=79 // pred_region
          %530 = dma.done [#allocation9], 2048
        $region96: #{tpu_custom_call.1} parent=79 // pred_fallthru
          _
        // Predicated region
        $region97: #{tpu_custom_call.1} parent=79 // pred_check
          %p531 = pneg %p336
        $region98: #{tpu_custom_call.1} parent=79 // pred_check_branch
          %533 = sbr.rel (%p531) target = $region100
        $region99: #{tpu_custom_call.1} parent=79 // pred_region
          %534 = dma.done [#allocation9], 2048
        $region100: #{tpu_custom_call.1} parent=79 // pred_fallthru
          _
        %p535 = scmp.lt.s32.totalorder %s32, 7
        %s536 = scalar_select %p535, %s32, 7
        %s537 = smul.addr %s536, 2
        %s538 = smul.addr %s537, 8
        %s539 = scalar_lea.vmem %s0, %s538
        %p540 = pneg %p53
        %p541 = pneg %p50
        %p542 = scmp.lt.s32.totalorder %s32, 7
        %s543 = scalar_select %p542, %s32, 7
        %s544 = scalar_lea.vmem %s1, %s543
        %p545 = pneg %p79
        %p546 = pneg %p76
        %p547 = scmp.lt.s32.totalorder %s32, 7
        %s548 = scalar_select %p547, %s32, 7
        %s549 = smul.addr %s548, 2
        %s550 = smul.addr %s549, 8
        %s551 = scalar_lea.vmem %s2, %s550
        %p552 = pneg %p105
        %p553 = pneg %p102
        %p554 = pneg %p126
        %p555 = pneg %p123
        %p556 = pneg %p147
        %p557 = pneg %p144
        %p558 = pneg %p168
        %p559 = pneg %p165
        %p560 = pneg %p189
        %p561 = pneg %p186
        %p562 = pneg %p210
        %p563 = pneg %p207
        %p564 = pneg %p231
        %p565 = pneg %p228
        %p566 = pneg %p252
        %p567 = pneg %p249
        %p568 = pneg %p273
        %p569 = pneg %p270
        %p570 = pneg %p294
        %p571 = pneg %p291
        %p572 = pneg %p315
        %p573 = pneg %p312
        %p574 = pneg %p336
        %p575 = pneg %p333
        %p576 = pneg %p357
        %p577 = pneg %p354
        %p578 = pneg %p383
        %p579 = pneg %p380
        %s580 = sand.u32 %s370, 1
        %s581 = scalar_lea.sflag [#allocation4], %s580
        %s582 = sand.u32 %s370, 1
        %s583 = scalar_lea.vmem [#allocation11], %s582
        %p584 = scmp.lt.s32.totalorder %s32, 7
        %s585 = scalar_select %p584, %s32, 7
        %s586 = smul.addr %s585, 2
        %s587 = smul.addr %s586, 8
        %s588 = scalar_lea.vmem %s0, %s587
        %p589 = scmp.lt.s32.totalorder %s32, 7
        %s590 = scalar_select %p589, %s32, 7
        %s591 = scalar_lea.vmem %s1, %s590
        %p592 = scmp.lt.s32.totalorder %s32, 7
        %s593 = scalar_select %p592, %s32, 7
        %s594 = smul.addr %s593, 2
        %s595 = smul.addr %s594, 8
        %s596 = scalar_lea.vmem %s2, %s595
        %v598 = vld [vmem:[%s588] sm:$0xff]
        %v599 = vld [vmem:[%s588 + $0x8] sm:$0xff]
        %v600 = vld [vmem:[%s591] sm:$0x1]
        %v601 = vld [vmem:[#allocation2] sm:$0x1]
        %v602 = vld [vmem:[%s4] sm:$0x1]
        %v603 = vld [vmem:[#allocation5] sm:$0xff]
        %v604 = vld [vmem:[#allocation5 + $0x8] sm:$0xf]
        %v605 = vld [vmem:[#allocation5 + $0xc] sm:$0xff]
        %v606 = vld [vmem:[#allocation5 + $0x14] sm:$0xf]
        %v607 = vld [vmem:[#allocation5 + $0x18] sm:$0xff]
        %v608 = vld [vmem:[#allocation5 + $0x20] sm:$0xf]
        %v609 = vld [vmem:[#allocation5 + $0x24] sm:$0xff]
        %v610 = vld [vmem:[#allocation5 + $0x2c] sm:$0xf]
        %v611 = vld [vmem:[#allocation5 + $0x30] sm:$0xff]
        %v612 = vld [vmem:[#allocation5 + $0x38] sm:$0xf]
        %v613 = vld [vmem:[#allocation5 + $0x3c] sm:$0xff]
        %v614 = vld [vmem:[#allocation5 + $0x44] sm:$0xf]
        %v615 = vld [vmem:[#allocation5 + $0x48] sm:$0xff]
        %v616 = vld [vmem:[#allocation5 + $0x50] sm:$0xf]
        %v617 = vld [vmem:[#allocation5 + $0x54] sm:$0xff]
        %v618 = vld [vmem:[#allocation5 + $0x5c] sm:$0xf]
        %v619 = vld [vmem:[#allocation5 + $0x60] sm:$0xff]
        %v620 = vld [vmem:[#allocation5 + $0x68] sm:$0xf]
        %v621 = vld [vmem:[#allocation5 + $0x6c] sm:$0xff]
        %v622 = vld [vmem:[#allocation5 + $0x74] sm:$0xf]
        %v623 = vld [vmem:[#allocation5 + $0x78] sm:$0xff]
        %v624 = vld [vmem:[#allocation5 + $0x80] sm:$0xf]
        %v625 = vld [vmem:[#allocation5 + $0x84] sm:$0xff]
        %v626 = vld [vmem:[#allocation5 + $0x8c] sm:$0xf]
        %v627 = vld [vmem:[#allocation5 + $0x90] sm:$0xff]
        %v628 = vld [vmem:[#allocation5 + $0x98] sm:$0xf]
        %v629 = vld [vmem:[#allocation5 + $0x9c] sm:$0xff]
        %v630 = vld [vmem:[#allocation5 + $0xa4] sm:$0xf]
        %v631 = vld [vmem:[#allocation5 + $0xa8] sm:$0xff]
        %v632 = vld [vmem:[#allocation5 + $0xb0] sm:$0xf]
        %v633 = vld [vmem:[#allocation5 + $0xb4] sm:$0xff]
        %v634 = vld [vmem:[#allocation5 + $0xbc] sm:$0xf]
        %v635 = vld [vmem:[%s6] sm:$0x7]
        %v636 = vld [vmem:[#allocation7] sm:$0xf]
        %v637 = vld [vmem:[#allocation7 + $0x4] sm:$0xf]
        %v638 = vld [vmem:[#allocation7 + $0x8] sm:$0xf]
        %v639 = vld [vmem:[#allocation7 + $0xc] sm:$0xf]
        %v640 = vld [vmem:[#allocation7 + $0x10] sm:$0xf]
        %v641 = vld [vmem:[#allocation7 + $0x14] sm:$0xf]
        %v642 = vld [vmem:[#allocation7 + $0x18] sm:$0xf]
        %v643 = vld [vmem:[#allocation7 + $0x1c] sm:$0xf]
        %v644 = vld [vmem:[#allocation7 + $0x20] sm:$0xf]
        %v645 = vld [vmem:[#allocation7 + $0x24] sm:$0xf]
        %v646 = vld [vmem:[#allocation7 + $0x28] sm:$0xf]
        %v647 = vld [vmem:[#allocation7 + $0x2c] sm:$0xf]
        %v648 = vld [vmem:[#allocation7 + $0x30] sm:$0xf]
        %v649 = vld [vmem:[#allocation7 + $0x34] sm:$0xf]
        %v650 = vld [vmem:[#allocation7 + $0x38] sm:$0xf]
        %v651 = vld [vmem:[#allocation7 + $0x3c] sm:$0xf]
        %v652 = vld [vmem:[%s8] sm:$0x1]
        %v653 = vld [vmem:[%s9] sm:$0x1]
        %v654 = vld [vmem:[%s10] sm:$0x1]
        %v655 = vld [vmem:[#allocation8] sm:$0xff]
        %v656 = vld [vmem:[#allocation8 + $0x8] sm:$0xff]
        %v657 = vld [vmem:[#allocation8 + $0x10] sm:$0xff]
        %v658 = vld [vmem:[#allocation8 + $0x18] sm:$0xff]
        %v659 = vld [vmem:[#allocation8 + $0x20] sm:$0xff]
        %v660 = vld [vmem:[#allocation8 + $0x28] sm:$0xff]
        %v661 = vld [vmem:[#allocation8 + $0x30] sm:$0xff]
        %v662 = vld [vmem:[#allocation8 + $0x38] sm:$0xff]
        %v663 = vld [vmem:[#allocation8 + $0x40] sm:$0xff]
        %v664 = vld [vmem:[#allocation8 + $0x48] sm:$0xff]
        %v665 = vld [vmem:[#allocation8 + $0x50] sm:$0xff]
        %v666 = vld [vmem:[#allocation8 + $0x58] sm:$0xff]
        %v667 = vld [vmem:[#allocation8 + $0x60] sm:$0xff]
        %v668 = vld [vmem:[#allocation8 + $0x68] sm:$0xff]
        %v669 = vld [vmem:[#allocation8 + $0x70] sm:$0xff]
        %v670 = vld [vmem:[#allocation8 + $0x78] sm:$0xff]
        %v671 = vld [vmem:[%s12] sm:$0x3]
        %v672 = vld [vmem:[#allocation10] sm:$0xf]
        %v673 = vld [vmem:[#allocation10 + $0x4] sm:$0xf]
        %v674 = vld [vmem:[#allocation10 + $0x8] sm:$0xf]
        %v675 = vld [vmem:[#allocation10 + $0xc] sm:$0xf]
        %v676 = vld [vmem:[#allocation10 + $0x10] sm:$0xf]
        %v677 = vld [vmem:[#allocation10 + $0x14] sm:$0xf]
        %v678 = vld [vmem:[#allocation10 + $0x18] sm:$0xf]
        %v679 = vld [vmem:[#allocation10 + $0x1c] sm:$0xf]
        %v680 = vld [vmem:[#allocation10 + $0x20] sm:$0xf]
        %v681 = vld [vmem:[#allocation10 + $0x24] sm:$0xf]
        %v682 = vld [vmem:[#allocation10 + $0x28] sm:$0xf]
        %v683 = vld [vmem:[#allocation10 + $0x2c] sm:$0xf]
        %v684 = vld [vmem:[#allocation10 + $0x30] sm:$0xf]
        %v685 = vld [vmem:[#allocation10 + $0x34] sm:$0xf]
        %v686 = vld [vmem:[#allocation10 + $0x38] sm:$0xf]
        %v687 = vld [vmem:[#allocation10 + $0x3c] sm:$0xf]
        %v688 = vld [vmem:[#allocation10 + $0x40] sm:$0xf]
        %v689 = vld [vmem:[#allocation10 + $0x44] sm:$0xf]
        %v690 = vld [vmem:[#allocation10 + $0x48] sm:$0xf]
        %v691 = vld [vmem:[#allocation10 + $0x4c] sm:$0xf]
        %v692 = vld [vmem:[#allocation10 + $0x50] sm:$0xf]
        %v693 = vld [vmem:[#allocation10 + $0x54] sm:$0xf]
        %v694 = vld [vmem:[#allocation10 + $0x58] sm:$0xf]
        %v695 = vld [vmem:[#allocation10 + $0x5c] sm:$0xf]
        %v696 = vld [vmem:[#allocation10 + $0x60] sm:$0xf]
        %v697 = vld [vmem:[#allocation10 + $0x64] sm:$0xf]
        %v698 = vld [vmem:[#allocation10 + $0x68] sm:$0xf]
        %v699 = vld [vmem:[#allocation10 + $0x6c] sm:$0xf]
        %v700 = vld [vmem:[#allocation10 + $0x70] sm:$0xf]
        %v701 = vld [vmem:[#allocation10 + $0x74] sm:$0xf]
        %v702 = vld [vmem:[#allocation10 + $0x78] sm:$0xf]
        %v703 = vld [vmem:[#allocation10 + $0x7c] sm:$0xf]
        %v704 = vld [vmem:[%s14] sm:$0x1]
        %705 = vadd.xlane.f32.xlu0 %v598
        %v706 = vpop.xlane.xlu0 %705
        %707 = vadd.xlane.f32.xlu0 %v599
        %v708 = vpop.xlane.xlu0 %707
        %v709 = vrcp.pop 128.0
        %v710 = vmul.f32 %v706, %v709
        %v711 = vmul.f32 %v708, %v709
        %v712 = vsub.f32 %v598, %v710
        %v713 = vsub.f32 %v599, %v711
        %v714 = vmul.f32 %v712, %v712
        %v715 = vmul.f32 %v713, %v713
        %716 = vadd.xlane.f32.xlu0 %v714
        %v717 = vpop.xlane.xlu0 %716
        %718 = vadd.xlane.f32.xlu0 %v715
        %v719 = vpop.xlane.xlu0 %718
        %v720 = vmul.f32 %v717, %v709
        %v721 = vmul.f32 %v719, %v709
        %v722 = vadd.f32 %v720, 1e-05
        %v723 = vadd.f32 %v721, 1e-05
        %v724 = vrsqrt.pop %v722
        %v725 = vrsqrt.pop %v723
        %v726 = vmul.f32 %v712, %v724
        %v727 = vmul.f32 %v713, %v725
        %v729 = vlaneseq
        %v730 = vshrl.u32 %v729, 7
        %v731 = vsub.s32 0, %v730
        %v732 = vrot.slane %v601, %v731
        %v734 = vmul.f32 %v726, %v732
        %v735 = vmul.f32 %v727, %v732
        %v737 = vlaneseq
        %v738 = vshrl.u32 %v737, 7
        %v739 = vsub.s32 0, %v738
        %v740 = vrot.slane %v602, %v739
        %v742 = vadd.f32 %v734, %v740
        %v743 = vadd.f32 %v735, %v740
        %v744 = vpack.c.bf16 %v743, %v742
        %v746 = vlaneseq
        %v747 = vshrl.u32 %v746, 7
        %v748 = vsub.s32 0, %v747
        %v749 = vrot.slane %v635, %v748
        %v750 = vlaneseq
        %v751 = vshrl.u32 %v750, 7
        %v752 = vsub.s32 1, %v751
        %v753 = vrot.slane %v635, %v752
        %v754 = vlaneseq
        %v755 = vshrl.u32 %v754, 7
        %v756 = vsub.s32 2, %v755
        %v757 = vrot.slane %v635, %v756
        %v793 = vunpack.c.l.b16 %v603
        %v794 = vunpack.c.h.b16 %v603
        %v795 = vunpack.c.l.b16 %v604
        %v796 = vunpack.c.l.b16 %v605
        %v797 = vunpack.c.h.b16 %v605
        %v798 = vunpack.c.l.b16 %v606
        %v799 = vunpack.c.l.b16 %v607
        %v800 = vunpack.c.h.b16 %v607
        %v801 = vunpack.c.l.b16 %v608
        %v802 = vunpack.c.l.b16 %v609
        %v803 = vunpack.c.h.b16 %v609
        %v804 = vunpack.c.l.b16 %v610
        %v805 = vunpack.c.l.b16 %v611
        %v806 = vunpack.c.h.b16 %v611
        %v807 = vunpack.c.l.b16 %v612
        %v808 = vunpack.c.l.b16 %v613
        %v809 = vunpack.c.h.b16 %v613
        %v810 = vunpack.c.l.b16 %v614
        %v811 = vunpack.c.l.b16 %v615
        %v812 = vunpack.c.h.b16 %v615
        %v813 = vunpack.c.l.b16 %v616
        %v814 = vunpack.c.l.b16 %v617
        %v815 = vunpack.c.h.b16 %v617
        %v816 = vunpack.c.l.b16 %v618
        %v817 = vunpack.c.l.b16 %v619
        %v818 = vunpack.c.h.b16 %v619
        %v819 = vunpack.c.l.b16 %v620
        %v820 = vunpack.c.l.b16 %v621
        %v821 = vunpack.c.h.b16 %v621
        %v822 = vunpack.c.l.b16 %v622
        %v823 = vunpack.c.l.b16 %v623
        %v824 = vunpack.c.h.b16 %v623
        %v825 = vunpack.c.l.b16 %v624
        %v826 = vunpack.c.l.b16 %v625
        %v827 = vunpack.c.h.b16 %v625
        %v828 = vunpack.c.l.b16 %v626
        %v829 = vunpack.c.l.b16 %v627
        %v830 = vunpack.c.h.b16 %v627
        %v831 = vunpack.c.l.b16 %v628
        %v832 = vunpack.c.l.b16 %v629
        %v833 = vunpack.c.h.b16 %v629
        %v834 = vunpack.c.l.b16 %v630
        %v835 = vunpack.c.l.b16 %v631
        %v836 = vunpack.c.h.b16 %v631
        %v837 = vunpack.c.l.b16 %v632
        %v838 = vunpack.c.l.b16 %v633
        %v839 = vunpack.c.h.b16 %v633
        %v840 = vunpack.c.l.b16 %v634
        %v841 = vpack.c.b16 %v796, %v793
        %v842 = vpack.c.b16 %v797, %v794
        %v843 = vpack.c.b16 %v798, %v795
        %v844 = vpack.c.b16 %v802, %v799
        %v845 = vpack.c.b16 %v803, %v800
        %v846 = vpack.c.b16 %v804, %v801
        %v847 = vpack.c.b16 %v808, %v805
        %v848 = vpack.c.b16 %v809, %v806
        %v849 = vpack.c.b16 %v810, %v807
        %v850 = vpack.c.b16 %v814, %v811
        %v851 = vpack.c.b16 %v815, %v812
        %v852 = vpack.c.b16 %v816, %v813
        %v853 = vpack.c.b16 %v820, %v817
        %v854 = vpack.c.b16 %v821, %v818
        %v855 = vpack.c.b16 %v822, %v819
        %v856 = vpack.c.b16 %v826, %v823
        %v857 = vpack.c.b16 %v827, %v824
        %v858 = vpack.c.b16 %v828, %v825
        %v859 = vpack.c.b16 %v832, %v829
        %v860 = vpack.c.b16 %v833, %v830
        %v861 = vpack.c.b16 %v834, %v831
        %v862 = vpack.c.b16 %v838, %v835
        %v863 = vpack.c.b16 %v839, %v836
        %v864 = vpack.c.b16 %v840, %v837
        %889 = vmatprep.subr.bf16.mxu0 %v863
        %890 = vmatpush1.bf16.msra.mxu0 %v862
        %891 = vmatprep.subr.bf16.mxu0 %v860
        %892 = vmatpush1.bf16.msra.mxu0 %v859
        %893 = vmatprep.subr.bf16.mxu0 %v857
        %894 = vmatpush1.bf16.msra.mxu0 %v856
        %895 = vmatprep.subr.bf16.mxu0 %v854
        %896 = vmatpush1.bf16.msra.mxu0 %v853
        %897 = vmatprep.subr.bf16.mxu0 %v851
        %898 = vmatpush1.bf16.msra.mxu0 %v850
        %899 = vmatprep.subr.bf16.mxu0 %v848
        %900 = vmatpush1.bf16.msra.mxu0 %v847
        %901 = vmatprep.subr.bf16.mxu0 %v845
        %902 = vmatpush1.bf16.msra.mxu0 %v844
        %903 = vmatprep.subr.bf16.mxu0 %v842
        %904 = vmatpush1.bf16.msra.mxu0 %v841
        %905 = vmatprep.subr.bf16.mxu0 0
        %906 = vmatpush2.bf16.msra.mxu0 0
        %907 = vmatprep.subr.bf16.mxu0 0
        %908 = vmatpush2.bf16.msra.mxu0 0
        %909 = vmatprep.subr.bf16.mxu0 0
        %910 = vmatpush2.bf16.msra.mxu0 0
        %911 = vmatprep.subr.bf16.mxu0 0
        %912 = vmatpush2.bf16.msra.mxu0 0
        %913 = vmatprep.subr.bf16.mxu0 0
        %914 = vmatpush2.bf16.msra.mxu0 0
        %915 = vmatprep.subr.bf16.mxu0 0
        %916 = vmatpush2.bf16.msra.mxu0 0
        %917 = vmatprep.subr.bf16.mxu0 0
        %918 = vmatpush2.bf16.msra.mxu0 0
        %919 = vmatprep.subr.bf16.mxu0 0
        %920 = vmatpush2.bf16.msra.mxu0 0
        %921 = vmatprep.mubr.bf16.mxu0 0
        %922 = vmatmul.mubr.bf16.gmra.mxu0 %v744
        %v923 = vpop.f32.mrf.mxu0
        %v924 = vadd.f32 %v749, %v923
        %v925 = vpop.f32.mrf.mxu0
        %v926 = vadd.f32 %v753, %v925
        %v927 = vpop.f32.mrf.mxu0
        %v928 = vadd.f32 %v749, %v927
        %v929 = vpop.f32.mrf.mxu0
        %v930 = vadd.f32 %v753, %v929
        %931 = vdwg.mxu0
        %932 = vmatprep.subr.bf16.mxu0 0
        %933 = vmatpush1.bf16.msra.mxu0 %v864
        %934 = vmatprep.subr.bf16.mxu0 0
        %935 = vmatpush1.bf16.msra.mxu0 %v861
        %936 = vmatprep.subr.bf16.mxu0 0
        %937 = vmatpush1.bf16.msra.mxu0 %v858
        %938 = vmatprep.subr.bf16.mxu0 0
        %939 = vmatpush1.bf16.msra.mxu0 %v855
        %940 = vmatprep.subr.bf16.mxu0 0
        %941 = vmatpush1.bf16.msra.mxu0 %v852
        %942 = vmatprep.subr.bf16.mxu0 0
        %943 = vmatpush1.bf16.msra.mxu0 %v849
        %944 = vmatprep.subr.bf16.mxu0 0
        %945 = vmatpush1.bf16.msra.mxu0 %v846
        %946 = vmatprep.subr.bf16.mxu0 0
        %947 = vmatpush1.bf16.msra.mxu0 %v843
        %948 = vmatprep.subr.bf16.mxu0 0
        %949 = vmatpush2.bf16.msra.mxu0 0
        %950 = vmatprep.subr.bf16.mxu0 0
        %951 = vmatpush2.bf16.msra.mxu0 0
        %952 = vmatprep.subr.bf16.mxu0 0
        %953 = vmatpush2.bf16.msra.mxu0 0
        %954 = vmatprep.subr.bf16.mxu0 0
        %955 = vmatpush2.bf16.msra.mxu0 0
        %956 = vmatprep.subr.bf16.mxu0 0
        %957 = vmatpush2.bf16.msra.mxu0 0
        %958 = vmatprep.subr.bf16.mxu0 0
        %959 = vmatpush2.bf16.msra.mxu0 0
        %960 = vmatprep.subr.bf16.mxu0 0
        %961 = vmatpush2.bf16.msra.mxu0 0
        %962 = vmatprep.subr.bf16.mxu0 0
        %963 = vmatpush2.bf16.msra.mxu0 0
        %964 = vmatprep.mubr.bf16.mxu0 0
        %965 = vmatmul.mubr.bf16.gmra.mxu0 %v744
        %v966 = vpop.f32.mrf.mxu0
        %v967 = vadd.f32 %v757, %v966
        %v968 = vpop.f32.mrf.mxu0
        %v969 = vpop.f32.mrf.mxu0
        %v970 = vadd.f32 %v757, %v969
        %v971 = vpop.f32.mrf.mxu0
        %972 = vdwg.mxu0
        %v973 = vpack.c.bf16 %v928, %v924
        %v974 = vpack.c.bf16 %v930, %v926
        %975 = vmatprep.subr.bf16.mxu0 0
        %976 = vmatpush1.bf16.xpose.msra.mxu0 0
        %977 = vmatprep.subr.bf16.mxu0 0
        %978 = vmatpush1.bf16.xpose.msra.mxu0 0
        %979 = vmatprep.subr.bf16.mxu0 0
        %980 = vmatpush1.bf16.xpose.msra.mxu0 0
        %981 = vmatprep.subr.bf16.mxu0 0
        %982 = vmatpush1.bf16.xpose.msra.mxu0 0
        %983 = vmatprep.subr.bf16.mxu0 0
        %984 = vmatpush1.bf16.xpose.msra.mxu0 0
        %985 = vmatprep.subr.bf16.mxu0 0
        %986 = vmatpush1.bf16.xpose.msra.mxu0 0
        %987 = vmatprep.subr.bf16.mxu0 0
        %988 = vmatpush1.bf16.xpose.msra.mxu0 0
        %989 = vmatprep.subr.bf16.mxu0 0
        %990 = vmatpush1.bf16.xpose.msra.mxu0 %v974
        %991 = vmatprep.subr.bf16.mxu0 0
        %992 = vmatpush2.bf16.xpose.msra.mxu0 0
        %993 = vmatprep.subr.bf16.mxu0 0
        %994 = vmatpush2.bf16.xpose.msra.mxu0 0
        %995 = vmatprep.subr.bf16.mxu0 0
        %996 = vmatpush2.bf16.xpose.msra.mxu0 0
        %997 = vmatprep.subr.bf16.mxu0 0
        %998 = vmatpush2.bf16.xpose.msra.mxu0 0
        %999 = vmatprep.subr.bf16.mxu0 0
        %1000 = vmatpush2.bf16.xpose.msra.mxu0 0
        %1001 = vmatprep.subr.bf16.mxu0 0
        %1002 = vmatpush2.bf16.xpose.msra.mxu0 0
        %1003 = vmatprep.subr.bf16.mxu0 0
        %1004 = vmatpush2.bf16.xpose.msra.mxu0 0
        %1005 = vmatprep.subr.bf16.mxu0 0
        %1006 = vmatpush2.bf16.xpose.msra.mxu0 0
        %1007 = vmatprep.mubr.bf16.mxu0 0
        %1008 = vmatmul.mubr.bf16.gmra.mxu0 %v973
        %v1009 = vpop.f32.mrf.mxu0
        %v1010 = vadd.f32 0.0, %v1009
        %v1011 = vpop.f32.mrf.mxu0
        %v1012 = vpop.f32.mrf.mxu0
        %v1013 = vadd.f32 0.0, %v1012
        %v1014 = vpop.f32.mrf.mxu0
        %1015 = vdwg.mxu0
        %v1016 = vmul.f32 %v1010, 0.088388346
        %v1017 = vmul.f32 %v1013, 0.088388346
        %v1019 = vlaneseq
        %v1020 = vshrl.u32 %v1019, 7
        %v1021 = vsub.s32 0, %v1020
        %v1022 = vrot.slane %v600, %v1021
        %v1024 = vadd.f32 %v1016, %v1022
        %v1025 = vadd.f32 %v1017, %v1022
        %vm1026 = vcmask 130048
        %v1027 = vsel %vm1026, %v1024, -inf
        %1028 = vmax.xlane.f32.xlu0 %v1027
        %v1029 = vpop.xlane.xlu0 %1028
        %v1030 = vsel %vm1026, %v1025, -inf
        %1031 = vmax.xlane.f32.xlu0 %v1030
        %v1032 = vpop.xlane.xlu0 %1031
        %v1033 = vsub.f32 %v1024, %v1029
        %v1034 = vsub.f32 %v1025, %v1032
        %v1035 = vmul.f32 %v1033, 1.442695
        %v1036 = vpow.pop %v1035
        %v1037 = vmul.f32 %v1034, 1.442695
        %v1038 = vpow.pop %v1037
        %v1039 = vsel %vm1026, %v1036, 0.0
        %1040 = vadd.xlane.f32.xlu0 %v1039
        %v1041 = vpop.xlane.xlu0 %1040
        %v1042 = vsel %vm1026, %v1038, 0.0
        %1043 = vadd.xlane.f32.xlu0 %v1042
        %v1044 = vpop.xlane.xlu0 %1043
        %v1045 = vrcp.pop %v1041
        %v1046 = vmul.f32 %v1036, %v1045
        %v1047 = vrcp.pop %v1044
        %v1048 = vmul.f32 %v1038, %v1047
        %v1049 = vpack.c.bf16 %v1048, %v1046
        %v1050 = vpack.c.bf16 %v970, %v967
        %v1052 = vsel %vm1026, %v1049, 0
        %1054 = vmatprep.subr.bf16.mxu0 0
        %1055 = vmatpush1.bf16.msra.mxu0 0
        %1056 = vmatprep.subr.bf16.mxu0 0
        %1057 = vmatpush1.bf16.msra.mxu0 0
        %1058 = vmatprep.subr.bf16.mxu0 0
        %1059 = vmatpush1.bf16.msra.mxu0 0
        %1060 = vmatprep.subr.bf16.mxu0 0
        %1061 = vmatpush1.bf16.msra.mxu0 0
        %1062 = vmatprep.subr.bf16.mxu0 0
        %1063 = vmatpush1.bf16.msra.mxu0 0
        %1064 = vmatprep.subr.bf16.mxu0 0
        %1065 = vmatpush1.bf16.msra.mxu0 0
        %1066 = vmatprep.subr.bf16.mxu0 0
        %1067 = vmatpush1.bf16.msra.mxu0 0
        %1068 = vmatprep.subr.bf16.mxu0 0
        %1069 = vmatpush1.bf16.msra.mxu0 %v1050
        %1070 = vmatprep.subr.bf16.mxu0 0
        %1071 = vmatpush2.bf16.msra.mxu0 0
        %1072 = vmatprep.subr.bf16.mxu0 0
        %1073 = vmatpush2.bf16.msra.mxu0 0
        %1074 = vmatprep.subr.bf16.mxu0 0
        %1075 = vmatpush2.bf16.msra.mxu0 0
        %1076 = vmatprep.subr.bf16.mxu0 0
        %1077 = vmatpush2.bf16.msra.mxu0 0
        %1078 = vmatprep.subr.bf16.mxu0 0
        %1079 = vmatpush2.bf16.msra.mxu0 0
        %1080 = vmatprep.subr.bf16.mxu0 0
        %1081 = vmatpush2.bf16.msra.mxu0 0
        %1082 = vmatprep.subr.bf16.mxu0 0
        %1083 = vmatpush2.bf16.msra.mxu0 0
        %1084 = vmatprep.subr.bf16.mxu0 0
        %1085 = vmatpush2.bf16.msra.mxu0 0
        %1086 = vmatprep.mubr.bf16.mxu0 0
        %1087 = vmatmul.mubr.bf16.gmra.mxu0 %v1052
        %v1088 = vpop.f32.mrf.mxu0
        %v1089 = vadd.f32 0.0, %v1088
        %v1090 = vpop.f32.mrf.mxu0
        %v1091 = vpop.f32.mrf.mxu0
        %v1092 = vadd.f32 0.0, %v1091
        %v1093 = vpop.f32.mrf.mxu0
        %1094 = vdwg.mxu0
        %v1095 = vpack.c.bf16 %v1092, %v1089
        %v1097 = vlaneseq
        %v1098 = vshrl.u32 %v1097, 7
        %v1099 = vsub.s32 0, %v1098
        %v1100 = vrot.slane %v652, %v1099
        %v1118 = vunpack.c.l.b16 %v636
        %v1119 = vunpack.c.l.b16 %v637
        %v1120 = vunpack.c.l.b16 %v638
        %v1121 = vunpack.c.l.b16 %v639
        %v1122 = vunpack.c.l.b16 %v640
        %v1123 = vunpack.c.l.b16 %v641
        %v1124 = vunpack.c.l.b16 %v642
        %v1125 = vunpack.c.l.b16 %v643
        %v1126 = vunpack.c.l.b16 %v644
        %v1127 = vunpack.c.l.b16 %v645
        %v1128 = vunpack.c.l.b16 %v646
        %v1129 = vunpack.c.l.b16 %v647
        %v1130 = vunpack.c.l.b16 %v648
        %v1131 = vunpack.c.l.b16 %v649
        %v1132 = vunpack.c.l.b16 %v650
        %v1133 = vunpack.c.l.b16 %v651
        %v1134 = vpack.c.b16 %v1119, %v1118
        %v1135 = vpack.c.b16 %v1121, %v1120
        %v1136 = vpack.c.b16 %v1123, %v1122
        %v1137 = vpack.c.b16 %v1125, %v1124
        %v1138 = vpack.c.b16 %v1127, %v1126
        %v1139 = vpack.c.b16 %v1129, %v1128
        %v1140 = vpack.c.b16 %v1131, %v1130
        %v1141 = vpack.c.b16 %v1133, %v1132
        %1150 = vmatprep.subr.bf16.mxu0 0
        %1151 = vmatpush1.bf16.msra.mxu0 %v1141
        %1152 = vmatprep.subr.bf16.mxu0 0
        %1153 = vmatpush1.bf16.msra.mxu0 %v1140
        %1154 = vmatprep.subr.bf16.mxu0 0
        %1155 = vmatpush1.bf16.msra.mxu0 %v1139
        %1156 = vmatprep.subr.bf16.mxu0 0
        %1157 = vmatpush1.bf16.msra.mxu0 %v1138
        %1158 = vmatprep.subr.bf16.mxu0 0
        %1159 = vmatpush1.bf16.msra.mxu0 %v1137
        %1160 = vmatprep.subr.bf16.mxu0 0
        %1161 = vmatpush1.bf16.msra.mxu0 %v1136
        %1162 = vmatprep.subr.bf16.mxu0 0
        %1163 = vmatpush1.bf16.msra.mxu0 %v1135
        %1164 = vmatprep.subr.bf16.mxu0 0
        %1165 = vmatpush1.bf16.msra.mxu0 %v1134
        %1166 = vmatprep.subr.bf16.mxu0 0
        %1167 = vmatpush2.bf16.msra.mxu0 0
        %1168 = vmatprep.subr.bf16.mxu0 0
        %1169 = vmatpush2.bf16.msra.mxu0 0
        %1170 = vmatprep.subr.bf16.mxu0 0
        %1171 = vmatpush2.bf16.msra.mxu0 0
        %1172 = vmatprep.subr.bf16.mxu0 0
        %1173 = vmatpush2.bf16.msra.mxu0 0
        %1174 = vmatprep.subr.bf16.mxu0 0
        %1175 = vmatpush2.bf16.msra.mxu0 0
        %1176 = vmatprep.subr.bf16.mxu0 0
        %1177 = vmatpush2.bf16.msra.mxu0 0
        %1178 = vmatprep.subr.bf16.mxu0 0
        %1179 = vmatpush2.bf16.msra.mxu0 0
        %1180 = vmatprep.subr.bf16.mxu0 0
        %1181 = vmatpush2.bf16.msra.mxu0 0
        %1182 = vmatprep.mubr.bf16.mxu0 0
        %1183 = vmatmul.mubr.bf16.gmra.mxu0 %v1095
        %v1184 = vpop.f32.mrf.mxu0
        %v1185 = vadd.f32 %v1100, %v1184
        %v1186 = vpop.f32.mrf.mxu0
        %v1187 = vpop.f32.mrf.mxu0
        %v1188 = vadd.f32 %v1100, %v1187
        %v1189 = vpop.f32.mrf.mxu0
        %1190 = vdwg.mxu0
        %v1191 = vadd.f32 %v598, %v1185
        %v1192 = vadd.f32 %v599, %v1188
        %1193 = vadd.xlane.f32.xlu0 %v1191
        %v1194 = vpop.xlane.xlu0 %1193
        %1195 = vadd.xlane.f32.xlu0 %v1192
        %v1196 = vpop.xlane.xlu0 %1195
        %v1197 = vmul.f32 %v1194, %v709
        %v1198 = vmul.f32 %v1196, %v709
        %v1199 = vsub.f32 %v1191, %v1197
        %v1200 = vsub.f32 %v1192, %v1198
        %v1201 = vmul.f32 %v1199, %v1199
        %v1202 = vmul.f32 %v1200, %v1200
        %1203 = vadd.xlane.f32.xlu0 %v1201
        %v1204 = vpop.xlane.xlu0 %1203
        %1205 = vadd.xlane.f32.xlu0 %v1202
        %v1206 = vpop.xlane.xlu0 %1205
        %v1207 = vmul.f32 %v1204, %v709
        %v1208 = vmul.f32 %v1206, %v709
        %v1209 = vadd.f32 %v1207, 1e-05
        %v1210 = vadd.f32 %v1208, 1e-05
        %v1211 = vrsqrt.pop %v1209
        %v1212 = vrsqrt.pop %v1210
        %v1213 = vmul.f32 %v1199, %v1211
        %v1214 = vmul.f32 %v1200, %v1212
        %v1216 = vlaneseq
        %v1217 = vshrl.u32 %v1216, 7
        %v1218 = vsub.s32 0, %v1217
        %v1219 = vrot.slane %v653, %v1218
        %v1221 = vmul.f32 %v1213, %v1219
        %v1222 = vmul.f32 %v1214, %v1219
        %v1224 = vlaneseq
        %v1225 = vshrl.u32 %v1224, 7
        %v1226 = vsub.s32 0, %v1225
        %v1227 = vrot.slane %v654, %v1226
        %v1229 = vadd.f32 %v1221, %v1227
        %v1230 = vadd.f32 %v1222, %v1227
        %v1231 = vpack.c.bf16 %v1230, %v1229
        %v1233 = vlaneseq
        %v1234 = vshrl.u32 %v1233, 7
        %v1235 = vsub.s32 0, %v1234
        %v1236 = vrot.slane %v671, %v1235
        %v1237 = vlaneseq
        %v1238 = vshrl.u32 %v1237, 7
        %v1239 = vsub.s32 1, %v1238
        %v1240 = vrot.slane %v671, %v1239
        %v1259 = vunpack.c.l.b16 %v655
        %v1260 = vunpack.c.h.b16 %v655
        %v1261 = vunpack.c.l.b16 %v656
        %v1262 = vunpack.c.h.b16 %v656
        %v1263 = vunpack.c.l.b16 %v657
        %v1264 = vunpack.c.h.b16 %v657
        %v1265 = vunpack.c.l.b16 %v658
        %v1266 = vunpack.c.h.b16 %v658
        %v1267 = vunpack.c.l.b16 %v659
        %v1268 = vunpack.c.h.b16 %v659
        %v1269 = vunpack.c.l.b16 %v660
        %v1270 = vunpack.c.h.b16 %v660
        %v1271 = vunpack.c.l.b16 %v661
        %v1272 = vunpack.c.h.b16 %v661
        %v1273 = vunpack.c.l.b16 %v662
        %v1274 = vunpack.c.h.b16 %v662
        %v1275 = vunpack.c.l.b16 %v663
        %v1276 = vunpack.c.h.b16 %v663
        %v1277 = vunpack.c.l.b16 %v664
        %v1278 = vunpack.c.h.b16 %v664
        %v1279 = vunpack.c.l.b16 %v665
        %v1280 = vunpack.c.h.b16 %v665
        %v1281 = vunpack.c.l.b16 %v666
        %v1282 = vunpack.c.h.b16 %v666
        %v1283 = vunpack.c.l.b16 %v667
        %v1284 = vunpack.c.h.b16 %v667
        %v1285 = vunpack.c.l.b16 %v668
        %v1286 = vunpack.c.h.b16 %v668
        %v1287 = vunpack.c.l.b16 %v669
        %v1288 = vunpack.c.h.b16 %v669
        %v1289 = vunpack.c.l.b16 %v670
        %v1290 = vunpack.c.h.b16 %v670
        %v1291 = vpack.c.b16 %v1261, %v1259
        %v1292 = vpack.c.b16 %v1262, %v1260
        %v1293 = vpack.c.b16 %v1265, %v1263
        %v1294 = vpack.c.b16 %v1266, %v1264
        %v1295 = vpack.c.b16 %v1269, %v1267
        %v1296 = vpack.c.b16 %v1270, %v1268
        %v1297 = vpack.c.b16 %v1273, %v1271
        %v1298 = vpack.c.b16 %v1274, %v1272
        %v1299 = vpack.c.b16 %v1277, %v1275
        %v1300 = vpack.c.b16 %v1278, %v1276
        %v1301 = vpack.c.b16 %v1281, %v1279
        %v1302 = vpack.c.b16 %v1282, %v1280
        %v1303 = vpack.c.b16 %v1285, %v1283
        %v1304 = vpack.c.b16 %v1286, %v1284
        %v1305 = vpack.c.b16 %v1289, %v1287
        %v1306 = vpack.c.b16 %v1290, %v1288
        %1323 = vmatprep.subr.bf16.mxu0 %v1306
        %1324 = vmatpush1.bf16.msra.mxu0 %v1305
        %1325 = vmatprep.subr.bf16.mxu0 %v1304
        %1326 = vmatpush1.bf16.msra.mxu0 %v1303
        %1327 = vmatprep.subr.bf16.mxu0 %v1302
        %1328 = vmatpush1.bf16.msra.mxu0 %v1301
        %1329 = vmatprep.subr.bf16.mxu0 %v1300
        %1330 = vmatpush1.bf16.msra.mxu0 %v1299
        %1331 = vmatprep.subr.bf16.mxu0 %v1298
        %1332 = vmatpush1.bf16.msra.mxu0 %v1297
        %1333 = vmatprep.subr.bf16.mxu0 %v1296
        %1334 = vmatpush1.bf16.msra.mxu0 %v1295
        %1335 = vmatprep.subr.bf16.mxu0 %v1294
        %1336 = vmatpush1.bf16.msra.mxu0 %v1293
        %1337 = vmatprep.subr.bf16.mxu0 %v1292
        %1338 = vmatpush1.bf16.msra.mxu0 %v1291
        %1339 = vmatprep.subr.bf16.mxu0 0
        %1340 = vmatpush2.bf16.msra.mxu0 0
        %1341 = vmatprep.subr.bf16.mxu0 0
        %1342 = vmatpush2.bf16.msra.mxu0 0
        %1343 = vmatprep.subr.bf16.mxu0 0
        %1344 = vmatpush2.bf16.msra.mxu0 0
        %1345 = vmatprep.subr.bf16.mxu0 0
        %1346 = vmatpush2.bf16.msra.mxu0 0
        %1347 = vmatprep.subr.bf16.mxu0 0
        %1348 = vmatpush2.bf16.msra.mxu0 0
        %1349 = vmatprep.subr.bf16.mxu0 0
        %1350 = vmatpush2.bf16.msra.mxu0 0
        %1351 = vmatprep.subr.bf16.mxu0 0
        %1352 = vmatpush2.bf16.msra.mxu0 0
        %1353 = vmatprep.subr.bf16.mxu0 0
        %1354 = vmatpush2.bf16.msra.mxu0 0
        %1355 = vmatprep.mubr.bf16.mxu0 0
        %1356 = vmatmul.mubr.bf16.gmra.mxu0 %v1231
        %v1357 = vpop.f32.mrf.mxu0
        %v1358 = vadd.f32 %v1236, %v1357
        %v1359 = vpop.f32.mrf.mxu0
        %v1360 = vadd.f32 %v1240, %v1359
        %v1361 = vpop.f32.mrf.mxu0
        %v1362 = vadd.f32 %v1236, %v1361
        %v1363 = vpop.f32.mrf.mxu0
        %v1364 = vadd.f32 %v1240, %v1363
        %1365 = vdwg.mxu0
        %v1366 = vmul.f32 %v1358, %v1358
        %v1367 = vmul.f32 %v1360, %v1360
        %v1368 = vmul.f32 %v1362, %v1362
        %v1369 = vmul.f32 %v1364, %v1364
        %v1370 = vmul.f32 %v1358, %v1366
        %v1371 = vmul.f32 %v1360, %v1367
        %v1372 = vmul.f32 %v1362, %v1368
        %v1373 = vmul.f32 %v1364, %v1369
        %v1374 = vmul.f32 %v1370, 0.044715
        %v1375 = vmul.f32 %v1371, 0.044715
        %v1376 = vmul.f32 %v1372, 0.044715
        %v1377 = vmul.f32 %v1373, 0.044715
        %v1378 = vadd.f32 %v1358, %v1374
        %v1379 = vadd.f32 %v1360, %v1375
        %v1380 = vadd.f32 %v1362, %v1376
        %v1381 = vadd.f32 %v1364, %v1377
        %v1382 = vmul.f32 %v1378, 0.7978846
        %v1383 = vmul.f32 %v1379, 0.7978846
        %v1384 = vmul.f32 %v1380, 0.7978846
        %v1385 = vmul.f32 %v1381, 0.7978846
        %v1386 = vtanh.pop %v1382
        %v1387 = vtanh.pop %v1383
        %v1388 = vtanh.pop %v1384
        %v1389 = vtanh.pop %v1385
        %v1390 = vadd.f32 %v1386, 1.0
        %v1391 = vadd.f32 %v1387, 1.0
        %v1392 = vadd.f32 %v1388, 1.0
        %v1393 = vadd.f32 %v1389, 1.0
        %v1394 = vmul.f32 %v1390, 0.5
        %v1395 = vmul.f32 %v1391, 0.5
        %v1396 = vmul.f32 %v1392, 0.5
        %v1397 = vmul.f32 %v1393, 0.5
        %v1398 = vmul.f32 %v1358, %v1394
        %v1399 = vmul.f32 %v1360, %v1395
        %v1400 = vmul.f32 %v1362, %v1396
        %v1401 = vmul.f32 %v1364, %v1397
        %v1402 = vpack.c.bf16 %v1400, %v1398
        %v1403 = vpack.c.bf16 %v1401, %v1399
        %v1405 = vlaneseq
        %v1406 = vshrl.u32 %v1405, 7
        %v1407 = vsub.s32 0, %v1406
        %v1408 = vrot.slane %v704, %v1407
        %v1442 = vunpack.c.l.b16 %v672
        %v1443 = vunpack.c.l.b16 %v673
        %v1444 = vunpack.c.l.b16 %v674
        %v1445 = vunpack.c.l.b16 %v675
        %v1446 = vunpack.c.l.b16 %v676
        %v1447 = vunpack.c.l.b16 %v677
        %v1448 = vunpack.c.l.b16 %v678
        %v1449 = vunpack.c.l.b16 %v679
        %v1450 = vunpack.c.l.b16 %v680
        %v1451 = vunpack.c.l.b16 %v681
        %v1452 = vunpack.c.l.b16 %v682
        %v1453 = vunpack.c.l.b16 %v683
        %v1454 = vunpack.c.l.b16 %v684
        %v1455 = vunpack.c.l.b16 %v685
        %v1456 = vunpack.c.l.b16 %v686
        %v1457 = vunpack.c.l.b16 %v687
        %v1458 = vunpack.c.l.b16 %v688
        %v1459 = vunpack.c.l.b16 %v689
        %v1460 = vunpack.c.l.b16 %v690
        %v1461 = vunpack.c.l.b16 %v691
        %v1462 = vunpack.c.l.b16 %v692
        %v1463 = vunpack.c.l.b16 %v693
        %v1464 = vunpack.c.l.b16 %v694
        %v1465 = vunpack.c.l.b16 %v695
        %v1466 = vunpack.c.l.b16 %v696
        %v1467 = vunpack.c.l.b16 %v697
        %v1468 = vunpack.c.l.b16 %v698
        %v1469 = vunpack.c.l.b16 %v699
        %v1470 = vunpack.c.l.b16 %v700
        %v1471 = vunpack.c.l.b16 %v701
        %v1472 = vunpack.c.l.b16 %v702
        %v1473 = vunpack.c.l.b16 %v703
        %v1474 = vpack.c.b16 %v1443, %v1442
        %v1475 = vpack.c.b16 %v1445, %v1444
        %v1476 = vpack.c.b16 %v1447, %v1446
        %v1477 = vpack.c.b16 %v1449, %v1448
        %v1478 = vpack.c.b16 %v1451, %v1450
        %v1479 = vpack.c.b16 %v1453, %v1452
        %v1480 = vpack.c.b16 %v1455, %v1454
        %v1481 = vpack.c.b16 %v1457, %v1456
        %v1482 = vpack.c.b16 %v1459, %v1458
        %v1483 = vpack.c.b16 %v1461, %v1460
        %v1484 = vpack.c.b16 %v1463, %v1462
        %v1485 = vpack.c.b16 %v1465, %v1464
        %v1486 = vpack.c.b16 %v1467, %v1466
        %v1487 = vpack.c.b16 %v1469, %v1468
        %v1488 = vpack.c.b16 %v1471, %v1470
        %v1489 = vpack.c.b16 %v1473, %v1472
        %1506 = vmatprep.subr.bf16.mxu0 0
        %1507 = vmatpush1.bf16.msra.mxu0 %v1481
        %1508 = vmatprep.subr.bf16.mxu0 0
        %1509 = vmatpush1.bf16.msra.mxu0 %v1480
        %1510 = vmatprep.subr.bf16.mxu0 0
        %1511 = vmatpush1.bf16.msra.mxu0 %v1479
        %1512 = vmatprep.subr.bf16.mxu0 0
        %1513 = vmatpush1.bf16.msra.mxu0 %v1478
        %1514 = vmatprep.subr.bf16.mxu0 0
        %1515 = vmatpush1.bf16.msra.mxu0 %v1477
        %1516 = vmatprep.subr.bf16.mxu0 0
        %1517 = vmatpush1.bf16.msra.mxu0 %v1476
        %1518 = vmatprep.subr.bf16.mxu0 0
        %1519 = vmatpush1.bf16.msra.mxu0 %v1475
        %1520 = vmatprep.subr.bf16.mxu0 0
        %1521 = vmatpush1.bf16.msra.mxu0 %v1474
        %1522 = vmatprep.subr.bf16.mxu0 0
        %1523 = vmatpush2.bf16.msra.mxu0 %v1489
        %1524 = vmatprep.subr.bf16.mxu0 0
        %1525 = vmatpush2.bf16.msra.mxu0 %v1488
        %1526 = vmatprep.subr.bf16.mxu0 0
        %1527 = vmatpush2.bf16.msra.mxu0 %v1487
        %1528 = vmatprep.subr.bf16.mxu0 0
        %1529 = vmatpush2.bf16.msra.mxu0 %v1486
        %1530 = vmatprep.subr.bf16.mxu0 0
        %1531 = vmatpush2.bf16.msra.mxu0 %v1485
        %1532 = vmatprep.subr.bf16.mxu0 0
        %1533 = vmatpush2.bf16.msra.mxu0 %v1484
        %1534 = vmatprep.subr.bf16.mxu0 0
        %1535 = vmatpush2.bf16.msra.mxu0 %v1483
        %1536 = vmatprep.subr.bf16.mxu0 0
        %1537 = vmatpush2.bf16.msra.mxu0 %v1482
        %1538 = vmatprep.mubr.bf16.mxu0 %v1403
        %1539 = vmatmul.mubr.bf16.gmra.mxu0 %v1402
        %v1540 = vpop.f32.mrf.mxu0
        %v1541 = vadd.f32 %v1408, %v1540
        %v1542 = vpop.f32.mrf.mxu0
        %v1543 = vpop.f32.mrf.mxu0
        %v1544 = vadd.f32 %v1408, %v1543
        %v1545 = vpop.f32.mrf.mxu0
        %1546 = vdwg.mxu0
        %v1547 = vadd.f32 %v1191, %v1541
        %v1548 = vadd.f32 %v1192, %v1544
        %v1549 = vld [vmem:[%s596] sm:$0xff]
        %v1550 = vld [vmem:[%s596 + $0x8] sm:$0xff]
        %1552 = vset.pattern.permute.xlu0 0
        %1553 = vperm.xlu0 %1552, %v1549
        %v1554 = vpop.permute.xlu0 %1553
        %1557 = vset.pattern.permute.xlu0 0
        %1558 = vperm.xlu0 %1557, %v1550
        %v1559 = vpop.permute.xlu0 %1558
        %v1561 = vmul.f32 %v1547, %v1554
        %v1562 = vmul.f32 %v1548, %v1559
        %v1563 = vadd.f32 %v1561, %v1562
        %v1564 = vrot.slane %v1563, 4
        %v1565 = vadd.f32 %v1563, %v1564
        %v1566 = vrot.slane %v1565, 2
        %v1567 = vadd.f32 %v1565, %v1566
        %v1568 = vrot.slane %v1567, 1
        %v1569 = vadd.f32 %v1567, %v1568
        %1570 = vst [vmem:[%s583] sm:$0x1] %v1569
        %s1571 = sand.u32 %s370, 1
        %s1572 = scalar_lea.sflag [#allocation4], %s1571
        %s1573 = sand.u32 %s370, 1
        %s1574 = scalar_lea.vmem [#allocation11], %s1573
        // Predicated region
        $region101: #{tpu_custom_call.1} parent=79 // pred_check
          %p1575 = pneg %p380
        $region102: #{tpu_custom_call.1} parent=79 // pred_check_branch
          %1577 = sbr.rel (%p1575) target = $region104
        $region103: #{tpu_custom_call.1} parent=79 // pred_region
          %s1579 = ssub.s32 16, 16
          %1580 = vsyncadd %s1572, %s1579
          %s1581 = smul.addr %s32, 16
          %s1582 = scalar_lea.hbm %s15, %s1581
          %s1584 = sshll.u32 %s1574, 4
          %s1585 = int_to_ptr.vmem [resolvable:$true] %s1584
          %1587 = dma.vmem_to_hbm [thread:$0]  %s1585, 16, %s1582, %s1572
        $region104: #{tpu_custom_call.1} parent=79 // pred_fallthru
          _
      $region80: #{tpu_custom_call.1} parent=5 // pred_fallthru
        _
      %p1588 = scmp.le.s32.totalorder 2, %s27
      // Predicated region
      $region105: #{tpu_custom_call.1} parent=5 // pred_check
        %p1589 = pneg %p1588
      $region106: #{tpu_custom_call.1} parent=5 // pred_check_branch
        %1591 = sbr.rel (%p1589) target = $region108
      $region107: #{tpu_custom_call.1} parent=5 // pred_region
        %s1592 = ssub.s32 %s27, 2
        // Predicated region
        $region109: #{tpu_custom_call.1} parent=107 // pred_check
          %p1593 = pneg %p386
        $region110: #{tpu_custom_call.1} parent=107 // pred_check_branch
          %1595 = sbr.rel (%p1593) target = $region112
        $region111: #{tpu_custom_call.1} parent=107 // pred_region
          %s1596 = sand.u32 %s371, 1
          %s1597 = scalar_lea.sflag [#allocation4], %s1596
          %s1598 = sand.u32 %s371, 1
          %s1599 = scalar_lea.vmem [#allocation11], %s1598
          %1600 = dma.done %s1597, 16
        $region112: #{tpu_custom_call.1} parent=107 // pred_fallthru
          _
      $region108: #{tpu_custom_call.1} parent=5 // pred_fallthru
        _
    $region6: #{tpu_custom_call.1} parent=1 // loop_footer
      %s31 = sadd.s32 1, %s27
    $region7: #{tpu_custom_call.1} parent=1 // loop_footer_branch
      %26 = sbr.rel target = $region3
    $region8: #{tpu_custom_call.1} parent=1 // loop_exit
      _
    %1601 = vsyncpa [#allocation3], 1
    %s1602 = scalar_lea.sflag [#allocation3], 1
    %1603 = vsyncpa %s1602, 1
    %1604 = vsyncpa [#allocation6], 1
    %1605 = vsyncpa [#allocation9], 1
    %1606 = vsyncpa [#allocation4], 1
    %s1607 = scalar_lea.sflag [#allocation4], 1
    %1608 = vsyncpa %s1607, 1

</llo_original>
